<compile_context>
chip_gen: v7x
topology: tpu7x:2x2x1
jax: 0.10.0
libtpu: 0.0.40
codegen_flags: <defaults>
</compile_context>

<pallas_src>
import functools

import jax
import jax.numpy as jnp
from jax.experimental import pallas as pl
from jax.experimental.pallas import tpu as pltpu


def _round_up(a: int, b: int) -> int:
    return ((a + b - 1) // b) * b


def _mlp_kernel(x_ref, w1_ref, b1_ref, w2_ref, b2_ref, o_ref):
    # x_ref: (tm, D) f32 tile in native layout (D = Cc*L, lane-dense).
    # w*_ref: (D, D) bf16 Kronecker-expanded weights (x @ W form).
    # b*_ref: (1, D) f32 biases repeated over L.
    x = x_ref[...].astype(jnp.bfloat16)
    h = jnp.dot(x, w1_ref[...], preferred_element_type=jnp.float32) + b1_ref[...]
    h = jnp.maximum(h, 0.0).astype(jnp.bfloat16)          # ReLU, back to bf16 for MXU
    y = jnp.dot(h, w2_ref[...], preferred_element_type=jnp.float32) + b2_ref[...]
    o_ref[...] = jax.nn.sigmoid(y).astype(o_ref.dtype)    # Sigmoid (EUP)


def prepare_attention_m_params(w1, b1, w2, b2, L):
    """Hoisted weight expansion: fold permute(0,1,2,4,3) into the weights.

    PyTorch Linear is x @ W.T, so on the flattened (Cc*L,) row:
      kron(W.T, I_L)[c*L + l, o*L + l'] = W[o, c] * delta(l, l')
    Built once, in bf16, outside the per-call forward.
    """
    eye_l = jnp.eye(L, dtype=jnp.float32)
    w1k = jnp.kron(w1.T.astype(jnp.float32), eye_l).astype(jnp.bfloat16)  # (D, D)
    w2k = jnp.kron(w2.T.astype(jnp.float32), eye_l).astype(jnp.bfloat16)  # (D, D)
    b1k = jnp.repeat(b1.astype(jnp.float32), L).reshape(1, -1)            # (1, D)
    b2k = jnp.repeat(b2.astype(jnp.float32), L).reshape(1, -1)            # (1, D)
    return w1k, b1k, w2k, b2k


def _pick_tile_m(M: int, tile_m: int) -> int:
    if M <= 8:
        return M  # single full-extent block (allowed even if not a multiple of 8)
    tm = _round_up(min(tile_m, M), 8)
    # Keep >= ~4 grid steps when M is large enough: v7x dual-TC sharding +
    # DMA/compute overlap need more than one iteration.
    tm = min(tm, max(8, _round_up(pl.cdiv(M, 4), 8)))
    return max(tm, 8)


@functools.partial(jax.jit, static_argnames=("tile_m",))
def attention_m_forward(x, w1k, b1k, w2k, b2k, *, tile_m=512):
    """x: (N, T, C, Cc, L) float32; w*k/b*k from prepare_attention_m_params."""
    N, T, C, Cc, L = x.shape
    D = Cc * L

    # Explicit guard: both kron-expanded bf16 weights must stay VMEM-resident.
    if 2 * D * D * 2 > 8 * 1024 * 1024:
        # TODO(synk): in-kernel XLU transpose path for large n_channel*L.
        raise NotImplementedError("n_channel*L too large for resident kron weights")

    # Native-layout flatten: each row is one contiguous (Cc, L) slab. Free.
    x2 = x.reshape(N * T * C, D)
    M = x2.shape[0]

    tm = _pick_tile_m(M, tile_m)
    grid = pl.cdiv(M, tm)  # ragged last block handled by Pallas (no pad/slice copies)

    cost = pl.CostEstimate(
        flops=4 * M * D * D,               # two (M,D)x(D,D) matmuls
        transcendentals=M * D,             # sigmoid
        bytes_accessed=2 * M * D * 4 + 2 * D * D * 2 + 2 * D * 4,
    )

    out2 = pl.pallas_call(
        _mlp_kernel,
        out_shape=jax.ShapeDtypeStruct((M, D), x.dtype),
        grid=(grid,),
        in_specs=[
            pl.BlockSpec((tm, D), lambda i: (i, 0)),   # x rows (lane-dense)
            pl.BlockSpec((D, D), lambda i: (0, 0)),    # kron(W1^T, I_L), bf16, resident
            pl.BlockSpec((1, D), lambda i: (0, 0)),    # b1 repeated over L
            pl.BlockSpec((D, D), lambda i: (0, 0)),    # kron(W2^T, I_L), bf16, resident
            pl.BlockSpec((1, D), lambda i: (0, 0)),    # b2 repeated over L
        ],
        out_specs=pl.BlockSpec((tm, D), lambda i: (i, 0)),
        compiler_params=pltpu.CompilerParams(
            dimension_semantics=("parallel",),         # shard rows across TCs (v7x)
            vmem_limit_bytes=32 * 1024 * 1024,         # headroom for bigger tiles (v6e)
        ),
        cost_estimate=cost,
    )(x2, w1k, b1k, w2k, b2k)

    # Output rows are already in native (Cc, L) layout: plain reshape back.
    return out2.reshape(N, T, C, Cc, L)


def _init_linear_params(key, fan_in, fan_out):
    # Deterministic init mimicking PyTorch nn.Linear defaults (uniform(-k, k)).
    kw, kb = jax.random.split(key)
    bound = 1.0 / jnp.sqrt(jnp.float32(fan_in))
    w = jax.random.uniform(kw, (fan_out, fan_in), jnp.float32, -bound, bound)
    b = jax.random.uniform(kb, (fan_out,), jnp.float32, -bound, bound)
    return w, b


def _reference_forward(x, w1, b1, w2, b2):
    # Pure-JAX f32 reference of the PyTorch module (explicit transposes).
    xp = jnp.transpose(x, (0, 1, 2, 4, 3))
    h = jnp.maximum(jnp.einsum("...c,oc->...o", xp, w1) + b1, 0.0)
    y = jax.nn.sigmoid(jnp.einsum("...c,oc->...o", h, w2) + b2)
    return jnp.transpose(y, (0, 1, 2, 4, 3))


if __name__ == "__main__":
    key = jax.random.PRNGKey(0)
    k_x, k_l1, k_l2 = jax.random.split(key, 3)

    # Small shapes consistent with the forward: x is 5-D (N, T, C, n_channel, L)
    N, T, C, n_channel, L = 2, 2, 3, 32, 16
    x = jax.random.normal(k_x, (N, T, C, n_channel, L), jnp.float32)

    w1, b1 = _init_linear_params(k_l1, n_channel, n_channel)
    w2, b2 = _init_linear_params(k_l2, n_channel, n_channel)

    # Weight expansion hoisted out of the forward (computed once, bf16).
    w1k, b1k, w2k, b2k = prepare_attention_m_params(w1, b1, w2, b2, L)

    out = attention_m_forward(x, w1k, b1k, w2k, b2k)
    out = jax.block_until_ready(out)

    ref = _reference_forward(x, w1, b1, w2, b2)
    assert out.shape == x.shape
    # bf16 MXU operands with f32 accumulation -> relaxed tolerance vs f32 reference.
    err = float(jnp.max(jnp.abs(out - ref)))
    assert err < 2e-2, f"max abs err {err}"

    print("KERNEL_OK")
</pallas_src>

<mosaic_0001>
module attributes {stable_mosaic.version = 11 : i64} {
  func.func @_mlp_kernel(%arg0: i32, %arg1: memref<8x512xf32, #tpu.memory_space<vmem>>, %arg2: memref<512x512xbf16, #tpu.memory_space<vmem>>, %arg3: memref<1x512xf32, #tpu.memory_space<vmem>>, %arg4: memref<512x512xbf16, #tpu.memory_space<vmem>>, %arg5: memref<1x512xf32, #tpu.memory_space<vmem>>, %arg6: memref<8x512xf32, #tpu.memory_space<vmem>>) attributes {dimension_semantics = [#tpu.dimension_semantics<parallel>], iteration_bounds = array<i64: 2>, scalar_prefetch = 0 : i64, scratch_operands = 0 : i64, tpu.core_type = #tpu.core_type<tc>, window_params = [{transform_indices = @transform_0, window_bounds = array<i64: 8, 512>}, {pipeline_mode = #tpu.pipeline_mode<synchronous>, transform_indices = @transform_1, window_bounds = array<i64: 512, 512>}, {pipeline_mode = #tpu.pipeline_mode<synchronous>, transform_indices = @transform_2, window_bounds = array<i64: 1, 512>}, {pipeline_mode = #tpu.pipeline_mode<synchronous>, transform_indices = @transform_3, window_bounds = array<i64: 512, 512>}, {pipeline_mode = #tpu.pipeline_mode<synchronous>, transform_indices = @transform_4, window_bounds = array<i64: 1, 512>}, {transform_indices = @transform_5, window_bounds = array<i64: 8, 512>}]} {
    %c0 = arith.constant 0 : index
    %c0_0 = arith.constant 0 : index
    %0 = vector.load %arg1[%c0, %c0_0] : memref<8x512xf32, #tpu.memory_space<vmem>>, vector<8x512xf32>
    %1 = arith.truncf %0 : vector<8x512xf32> to vector<8x512xbf16>
    %c0_1 = arith.constant 0 : index
    %c0_2 = arith.constant 0 : index
    %2 = vector.load %arg2[%c0_1, %c0_2] : memref<512x512xbf16, #tpu.memory_space<vmem>>, vector<512x512xbf16>
    %cst = arith.constant dense<0.000000e+00> : vector<8x512xf32>
    %3 = tpu.matmul %1, %2, %cst {dimension_numbers = #tpu.dot_dimension_numbers<[1], [0], [0], [1], [0, 0, 1, 1], [], []>} : vector<8x512xbf16>, vector<512x512xbf16>, vector<8x512xf32> -> vector<8x512xf32>
    %c0_3 = arith.constant 0 : index
    %c0_4 = arith.constant 0 : index
    %4 = vector.load %arg3[%c0_3, %c0_4] : memref<1x512xf32, #tpu.memory_space<vmem>>, vector<1x512xf32>
    %5 = vector.broadcast %4 : vector<1x512xf32> to vector<8x512xf32>
    %6 = arith.addf %3, %5 : vector<8x512xf32>
    %cst_5 = arith.constant 0.000000e+00 : f32
    %7 = vector.broadcast %cst_5 : f32 to vector<8x512xf32>
    %8 = arith.maximumf %6, %7 : vector<8x512xf32>
    %9 = arith.truncf %8 : vector<8x512xf32> to vector<8x512xbf16>
    %c0_6 = arith.constant 0 : index
    %c0_7 = arith.constant 0 : index
    %10 = vector.load %arg4[%c0_6, %c0_7] : memref<512x512xbf16, #tpu.memory_space<vmem>>, vector<512x512xbf16>
    %cst_8 = arith.constant dense<0.000000e+00> : vector<8x512xf32>
    %11 = tpu.matmul %9, %10, %cst_8 {dimension_numbers = #tpu.dot_dimension_numbers<[1], [0], [0], [1], [0, 0, 1, 1], [], []>} : vector<8x512xbf16>, vector<512x512xbf16>, vector<8x512xf32> -> vector<8x512xf32>
    %c0_9 = arith.constant 0 : index
    %c0_10 = arith.constant 0 : index
    %12 = vector.load %arg5[%c0_9, %c0_10] : memref<1x512xf32, #tpu.memory_space<vmem>>, vector<1x512xf32>
    %13 = vector.broadcast %12 : vector<1x512xf32> to vector<8x512xf32>
    %14 = arith.addf %11, %13 : vector<8x512xf32>
    %15 = arith.negf %14 : vector<8x512xf32>
    %16 = math.exp %15 : vector<8x512xf32>
    %cst_11 = arith.constant 1.000000e+00 : f32
    %17 = vector.broadcast %cst_11 : f32 to vector<8x512xf32>
    %18 = arith.addf %17, %16 : vector<8x512xf32>
    %19 = arith.divf %17, %18 : vector<8x512xf32>
    %c0_12 = arith.constant 0 : index
    %c0_13 = arith.constant 0 : index
    %20 = vector.load %arg6[%c0_12, %c0_13] : memref<8x512xf32, #tpu.memory_space<vmem>>, vector<8x512xf32>
    tpu.vector_store %arg6[%c0_12, %c0_13], %19 {strides = array<i32>} : memref<8x512xf32, #tpu.memory_space<vmem>>, vector<8x512xf32>,
    return
  }
  func.func @transform_0(%arg0: i32) -> (i32, i32) {
    %c0_i32 = arith.constant 0 : i32
    %c0_i32_0 = arith.constant 0 : i32
    return %arg0, %c0_i32 : i32, i32
  }
  func.func @transform_1(%arg0: i32) -> (i32, i32) {
    %c0_i32 = arith.constant 0 : i32
    %c0_i32_0 = arith.constant 0 : i32
    %c0_i32_1 = arith.constant 0 : i32
    return %c0_i32, %c0_i32_0 : i32, i32
  }
  func.func @transform_2(%arg0: i32) -> (i32, i32) {
    %c0_i32 = arith.constant 0 : i32
    %c0_i32_0 = arith.constant 0 : i32
    %c0_i32_1 = arith.constant 0 : i32
    return %c0_i32, %c0_i32_0 : i32, i32
  }
  func.func @transform_3(%arg0: i32) -> (i32, i32) {
    %c0_i32 = arith.constant 0 : i32
    %c0_i32_0 = arith.constant 0 : i32
    %c0_i32_1 = arith.constant 0 : i32
    return %c0_i32, %c0_i32_0 : i32, i32
  }
  func.func @transform_4(%arg0: i32) -> (i32, i32) {
    %c0_i32 = arith.constant 0 : i32
    %c0_i32_0 = arith.constant 0 : i32
    %c0_i32_1 = arith.constant 0 : i32
    return %c0_i32, %c0_i32_0 : i32, i32
  }
  func.func @transform_5(%arg0: i32) -> (i32, i32) {
    %c0_i32 = arith.constant 0 : i32
    %c0_i32_0 = arith.constant 0 : i32
    return %arg0, %c0_i32 : i32, i32
  }
}

</mosaic_0001>

<llo_original>
// kernel: attention_m_forward.1
$region0: #{attention_m_forward.1}
  #allocation0 [shape = 'u32[]', space=smem, size = 0x4, offset = 0x4, fixed_abs, tag = 'smem constant byte address 0x4 - core index']
  #allocation1 [shape = 'u32[144,128]{1,0:T(1,128)}', space=vmem, size = 0x12000, scoped, tag = 'internal scratch']
  %s0 = inlined_call_operand.vmem [shape: f32[12,512], index: 0, kind: input, shape index: {}]
  %s1 = inlined_call_operand.vmem [shape: bf16[512,512], index: 1, kind: input, shape index: {}]
  %s2 = inlined_call_operand.hbm [shape: f32[1,512], index: 2, kind: input, shape index: {}]
  %s3 = inlined_call_operand.hbm [shape: bf16[512,512], index: 3, kind: input, shape index: {}]
  %s4 = inlined_call_operand.vmem [shape: f32[1,512], index: 4, kind: input, shape index: {}]
  %s5 = inlined_call_operand.vmem [shape: f32[12,512], index: 5, kind: output, shape index: {}]
  %s6 = sld [smem:[#allocation0]]
  $region61: #{attention_m_forward.1} parent=0
    _
  %s8 = ssub.s32 1, %s6
  %s9 = scalar_select 0, %s8, %s6
  $region1: #{attention_m_forward.1} parent=0
    #allocation2 [shape = 'u8[2048]{0}', space=vmem, size = 0x800, scoped, tag = 'input window, operand 2, single buffered']
    #allocation3 [shape = 's32[2]{0}', space=sflag, size = 0x8, scoped, tag = 'scoped memory for attention_m_forward.1']
    #allocation4 [shape = 'u8[524288]{0}', space=vmem, size = 0x80000, scoped, tag = 'input window, operand 3, single buffered']
    #allocation5 [shape = 's32[1]{0}', space=sflag, size = 0x4, scoped, tag = 'scoped memory for attention_m_forward.1']
    %10 = vsyncpa [#allocation3], 0
    %11 = vsyncpa [#allocation5], 0
    loop: start=0, step=1, limit=4
    $region2: #{attention_m_forward.1} parent=1 // loop_pre_header
      _
    $region3: #{attention_m_forward.1} parent=1 // loop_header
      %s13 = sphi 0, %s17
      %p14 = scmp.ge.s32.totalorder %s13, 4
      %s23 = sphi 0, %s25
      %s26 = sphi 0, %s23
      %s27 = sphi 0, %s26
      %s43 = sphi 0, %s27
      %s47 = sphi 0, %s47
      %s49 = sphi 0, %s47
      %s50 = sphi 0, %s49
      %s64 = sphi 0, %s50
      %s68 = sphi 0, %s68
      %s70 = sphi 0, %s68
      %s71 = sphi 0, %s70
      %s85 = sphi 0, %s71
      %s89 = sphi 0, %s89
      %s91 = sphi 0, %s89
      %s92 = sphi 0, %s91
      %s106 = sphi 0, %s92
      %s110 = sphi 0, %s110
      %s112 = sphi 0, %s110
      %s113 = sphi 0, %s112
      %s127 = sphi 0, %s113
      %s133 = sphi 0, %s135
      %s136 = sphi 0, %s133
      %s137 = sphi 0, %s136
      %s153 = sphi 0, %s137
    $region4: #{attention_m_forward.1} parent=1 // loop_header_branch
      %16 = sbr.rel (%p14) target = $region8
    $region5: #{attention_m_forward.1} parent=1 // loop_body
      %s18 = ssub.s32 %s13, 1
      %s19 = ssub.s32 %s13, 2
      %s20 = sadd.s32 %s13, 1
      %s21 = ssub.s32 %s13, %s20
      %p22 = scmp.eq.s32.totalorder %s21, 0
      %s24 = sadd.s32 %s23, 1
      %s25 = scalar_select %p22, %s23, %s24
      %p28 = pneg %p22
      %p29 = scmp.eq.s32.totalorder %s13, 1
      %p30 = por %p28, %p29
      %p31 = scmp.ne.s32.totalorder %s23, %s26
      %p32 = scmp.eq.s32.totalorder %s13, 0
      %p33 = por %p31, %p32
      %p34 = scmp.ne.s32.totalorder %s23, %s26
      %p35 = scmp.eq.s32.totalorder %s18, 1
      %p36 = por %p34, %p35
      %p37 = scmp.ne.s32.totalorder %s26, %s27
      %p38 = scmp.eq.s32.totalorder %s18, 0
      %p39 = por %p37, %p38
      %p40 = scmp.ne.s32.totalorder %s26, %s27
      %p41 = scmp.eq.s32.totalorder %s19, 1
      %p42 = por %p40, %p41
      %p44 = scmp.ne.s32.totalorder %s27, %s43
      %p45 = scmp.eq.s32.totalorder %s19, 0
      %p46 = por %p44, %p45
      %s48 = sadd.s32 %s47, 1
      %p51 = scmp.eq.s32.totalorder %s13, 1
      %p52 = scmp.ne.s32.totalorder %s47, %s49
      %p53 = scmp.eq.s32.totalorder %s13, 0
      %p54 = por %p52, %p53
      %p55 = scmp.ne.s32.totalorder %s47, %s49
      %p56 = scmp.eq.s32.totalorder %s18, 1
      %p57 = por %p55, %p56
      %p58 = scmp.ne.s32.totalorder %s49, %s50
      %p59 = scmp.eq.s32.totalorder %s18, 0
      %p60 = por %p58, %p59
      %p61 = scmp.ne.s32.totalorder %s49, %s50
      %p62 = scmp.eq.s32.totalorder %s19, 1
      %p63 = por %p61, %p62
      %p65 = scmp.ne.s32.totalorder %s50, %s64
      %p66 = scmp.eq.s32.totalorder %s19, 0
      %p67 = por %p65, %p66
      %s69 = sadd.s32 %s68, 1
      %p72 = scmp.eq.s32.totalorder %s13, 1
      %p73 = scmp.ne.s32.totalorder %s68, %s70
      %p74 = scmp.eq.s32.totalorder %s13, 0
      %p75 = por %p73, %p74
      %p76 = scmp.ne.s32.totalorder %s68, %s70
      %p77 = scmp.eq.s32.totalorder %s18, 1
      %p78 = por %p76, %p77
      %p79 = scmp.ne.s32.totalorder %s70, %s71
      %p80 = scmp.eq.s32.totalorder %s18, 0
      %p81 = por %p79, %p80
      %p82 = scmp.ne.s32.totalorder %s70, %s71
      %p83 = scmp.eq.s32.totalorder %s19, 1
      %p84 = por %p82, %p83
      %p86 = scmp.ne.s32.totalorder %s71, %s85
      %p87 = scmp.eq.s32.totalorder %s19, 0
      %p88 = por %p86, %p87
      %s90 = sadd.s32 %s89, 1
      %p93 = scmp.eq.s32.totalorder %s13, 1
      %p94 = scmp.ne.s32.totalorder %s89, %s91
      %p95 = scmp.eq.s32.totalorder %s13, 0
      %p96 = por %p94, %p95
      %p97 = scmp.ne.s32.totalorder %s89, %s91
      %p98 = scmp.eq.s32.totalorder %s18, 1
      %p99 = por %p97, %p98
      %p100 = scmp.ne.s32.totalorder %s91, %s92
      %p101 = scmp.eq.s32.totalorder %s18, 0
      %p102 = por %p100, %p101
      %p103 = scmp.ne.s32.totalorder %s91, %s92
      %p104 = scmp.eq.s32.totalorder %s19, 1
      %p105 = por %p103, %p104
      %p107 = scmp.ne.s32.totalorder %s92, %s106
      %p108 = scmp.eq.s32.totalorder %s19, 0
      %p109 = por %p107, %p108
      %s111 = sadd.s32 %s110, 1
      %p114 = scmp.eq.s32.totalorder %s13, 1
      %p115 = scmp.ne.s32.totalorder %s110, %s112
      %p116 = scmp.eq.s32.totalorder %s13, 0
      %p117 = por %p115, %p116
      %p118 = scmp.ne.s32.totalorder %s110, %s112
      %p119 = scmp.eq.s32.totalorder %s18, 1
      %p120 = por %p118, %p119
      %p121 = scmp.ne.s32.totalorder %s112, %s113
      %p122 = scmp.eq.s32.totalorder %s18, 0
      %p123 = por %p121, %p122
      %p124 = scmp.ne.s32.totalorder %s112, %s113
      %p125 = scmp.eq.s32.totalorder %s19, 1
      %p126 = por %p124, %p125
      %p128 = scmp.ne.s32.totalorder %s113, %s127
      %p129 = scmp.eq.s32.totalorder %s19, 0
      %p130 = por %p128, %p129
      %s131 = ssub.s32 %s13, %s20
      %p132 = scmp.eq.s32.totalorder %s131, 0
      %s134 = sadd.s32 %s133, 1
      %s135 = scalar_select %p132, %s133, %s134
      %p138 = pneg %p132
      %p139 = scmp.eq.s32.totalorder %s13, 1
      %p140 = por %p138, %p139
      %p141 = scmp.ne.s32.totalorder %s133, %s136
      %p142 = scmp.eq.s32.totalorder %s13, 0
      %p143 = por %p141, %p142
      %p144 = scmp.ne.s32.totalorder %s133, %s136
      %p145 = scmp.eq.s32.totalorder %s18, 1
      %p146 = por %p144, %p145
      %p147 = scmp.ne.s32.totalorder %s136, %s137
      %p148 = scmp.eq.s32.totalorder %s18, 0
      %p149 = por %p147, %p148
      %p150 = scmp.ne.s32.totalorder %s136, %s137
      %p151 = scmp.eq.s32.totalorder %s19, 1
      %p152 = por %p150, %p151
      %p154 = scmp.ne.s32.totalorder %s137, %s153
      %p155 = scmp.eq.s32.totalorder %s19, 0
      %p156 = por %p154, %p155
      %p157 = scmp.le.s32.totalorder 1, %s13
      %p158 = scmp.lt.s32.totalorder %s13, 3
      %p159 = pnand %p157, %p158
      %p160 = pneg %p159
      // Predicated region
      $region9: #{attention_m_forward.1} parent=5 // pred_check
        _
      $region10: #{attention_m_forward.1} parent=5 // pred_check_branch
        %162 = sbr.rel (%p159) target = $region12
      $region11: #{attention_m_forward.1} parent=5 // pred_region
        %s163 = ssub.s32 %s13, 1
        // Predicated region
        $region13: #{attention_m_forward.1} parent=11 // pred_check
          %p164 = pneg %p60
        $region14: #{attention_m_forward.1} parent=11 // pred_check_branch
          %166 = sbr.rel (%p164) target = $region16
        $region15: #{attention_m_forward.1} parent=11 // pred_region
          _
        $region16: #{attention_m_forward.1} parent=11 // pred_fallthru
          _
        // Predicated region
        $region17: #{attention_m_forward.1} parent=11 // pred_check
          %p167 = pneg %p81
        $region18: #{attention_m_forward.1} parent=11 // pred_check_branch
          %169 = sbr.rel (%p167) target = $region20
        $region19: #{attention_m_forward.1} parent=11 // pred_region
          %s171 = ssub.s32 64, 64
          %172 = vsyncadd [#allocation3], %s171
          %s174 = sshll.u32 [#allocation2], 4
          %s175 = int_to_ptr.vmem [resolvable:$true] %s174
          %177 = dma.hbm_to_vmem [thread:$0]  %s2, 64, %s175, [#allocation3]
        $region20: #{attention_m_forward.1} parent=11 // pred_fallthru
          _
        // Predicated region
        $region21: #{attention_m_forward.1} parent=11 // pred_check
          %p178 = pneg %p102
        $region22: #{attention_m_forward.1} parent=11 // pred_check_branch
          %180 = sbr.rel (%p178) target = $region24
        $region23: #{attention_m_forward.1} parent=11 // pred_region
          %s182 = ssub.s32 16384, 16384
          %183 = vsyncadd [#allocation5], %s182
          %s184 = sshll.u32 [#allocation4], 4
          %s185 = int_to_ptr.vmem [resolvable:$true] %s184
          %190 = dma.hbm_to_vmem [thread:$0]  %s3, 16384, %s185, [#allocation5], 256, 256, 16
        $region24: #{attention_m_forward.1} parent=11 // pred_fallthru
          _
        // Predicated region
        $region25: #{attention_m_forward.1} parent=11 // pred_check
          %p191 = pneg %p123
        $region26: #{attention_m_forward.1} parent=11 // pred_check_branch
          %193 = sbr.rel (%p191) target = $region28
        $region27: #{attention_m_forward.1} parent=11 // pred_region
          _
        $region28: #{attention_m_forward.1} parent=11 // pred_fallthru
          _
      $region12: #{attention_m_forward.1} parent=5 // pred_fallthru
        _
      %p194 = scmp.lt.s32.totalorder %s13, 2
      // Predicated region
      $region29: #{attention_m_forward.1} parent=5 // pred_check
        %p195 = pneg %p194
      $region30: #{attention_m_forward.1} parent=5 // pred_check_branch
        %197 = sbr.rel (%p195) target = $region32
      $region31: #{attention_m_forward.1} parent=5 // pred_region
        // Predicated region
        $region33: #{attention_m_forward.1} parent=31 // pred_check
          %p198 = pneg %p33
        $region34: #{attention_m_forward.1} parent=31 // pred_check_branch
          %200 = sbr.rel (%p198) target = $region36
        $region35: #{attention_m_forward.1} parent=31 // pred_region
          %p201 = scmp.lt.s32.totalorder %s13, 1
          %s202 = scalar_select %p201, %s13, 1
          %s203 = smul.addr %s202, 4
          %s204 = smul.addr %s203, 8
          %s205 = scalar_lea.vmem %s0, %s204
        $region36: #{attention_m_forward.1} parent=31 // pred_fallthru
          _
      $region32: #{attention_m_forward.1} parent=5 // pred_fallthru
        _
      %p206 = scmp.le.s32.totalorder 1, %s13
      %p207 = scmp.lt.s32.totalorder %s13, 3
      %p208 = pnand %p206, %p207
      %p209 = pneg %p208
      // Predicated region
      $region37: #{attention_m_forward.1} parent=5 // pred_check
        _
      $region38: #{attention_m_forward.1} parent=5 // pred_check_branch
        %211 = sbr.rel (%p208) target = $region40
      $region39: #{attention_m_forward.1} parent=5 // pred_region
        %s212 = ssub.s32 %s13, 1
        // Predicated region
        $region41: #{attention_m_forward.1} parent=39 // pred_check
          %p213 = pneg %p81
        $region42: #{attention_m_forward.1} parent=39 // pred_check_branch
          %215 = sbr.rel (%p213) target = $region44
        $region43: #{attention_m_forward.1} parent=39 // pred_region
          %216 = dma.done [#allocation3], 64
        $region44: #{attention_m_forward.1} parent=39 // pred_fallthru
          _
        // Predicated region
        $region45: #{attention_m_forward.1} parent=39 // pred_check
          %p217 = pneg %p102
        $region46: #{attention_m_forward.1} parent=39 // pred_check_branch
          %219 = sbr.rel (%p217) target = $region48
        $region47: #{attention_m_forward.1} parent=39 // pred_region
          %220 = dma.done [#allocation5], 16384
        $region48: #{attention_m_forward.1} parent=39 // pred_fallthru
          _
        %p221 = scmp.lt.s32.totalorder %s18, 1
        %s222 = scalar_select %p221, %s18, 1
        %s223 = smul.addr %s222, 4
        %s224 = smul.addr %s223, 8
        %s225 = scalar_lea.vmem %s0, %s224
        %p226 = pneg %p39
        %p227 = pneg %p36
        %p228 = pneg %p60
        %p229 = pneg %p57
        %p230 = pneg %p81
        %p231 = pneg %p78
        %p232 = pneg %p102
        %p233 = pneg %p99
        %p234 = pneg %p123
        %p235 = pneg %p120
        %p236 = pneg %p149
        %p237 = pneg %p146
        %p238 = scmp.lt.s32.totalorder %s18, 1
        %s239 = scalar_select %p238, %s18, 1
        %s240 = smul.addr %s239, 4
        %s241 = smul.addr %s240, 8
        %s242 = scalar_lea.vmem %s5, %s241
        %p243 = scmp.lt.s32.totalorder %s18, 1
        %s244 = scalar_select %p243, %s18, 1
        %s245 = smul.addr %s244, 4
        %s246 = smul.addr %s245, 8
        %s247 = scalar_lea.vmem %s0, %s246
        %p248 = scmp.lt.s32.totalorder %s18, 1
        %s249 = scalar_select %p248, %s18, 1
        %s250 = smul.addr %s249, 4
        %s251 = smul.addr %s250, 8
        %s252 = scalar_lea.vmem %s5, %s251
        %v253 = vld [vmem:[%s247] sm:$0xff]
        %v254 = vld [vmem:[%s247 + $0x8] sm:$0xff]
        %v255 = vld [vmem:[%s247 + $0x10] sm:$0xff]
        %v256 = vld [vmem:[%s247 + $0x18] sm:$0xff]
        %v257 = vpack.c.bf16 %v253, %v253
        %v258 = vpack.c.bf16 %v254, %v254
        %v259 = vpack.c.bf16 %v255, %v255
        %v260 = vpack.c.bf16 %v256, %v256
        %v261 = vld [vmem:[%s1] sm:$0xff]
        %v262 = vld [vmem:[%s1 + $0x8] sm:$0xff]
        %v263 = vld [vmem:[%s1 + $0x10] sm:$0xff]
        %v264 = vld [vmem:[%s1 + $0x18] sm:$0xff]
        %v265 = vld [vmem:[%s1 + $0x20] sm:$0xff]
        %v266 = vld [vmem:[%s1 + $0x28] sm:$0xff]
        %v267 = vld [vmem:[%s1 + $0x30] sm:$0xff]
        %v268 = vld [vmem:[%s1 + $0x38] sm:$0xff]
        %v269 = vld [vmem:[%s1 + $0x40] sm:$0xff]
        %v270 = vld [vmem:[%s1 + $0x48] sm:$0xff]
        %v271 = vld [vmem:[%s1 + $0x50] sm:$0xff]
        %v272 = vld [vmem:[%s1 + $0x58] sm:$0xff]
        %v273 = vld [vmem:[%s1 + $0x60] sm:$0xff]
        %v274 = vld [vmem:[%s1 + $0x68] sm:$0xff]
        %v275 = vld [vmem:[%s1 + $0x70] sm:$0xff]
        %v276 = vld [vmem:[%s1 + $0x78] sm:$0xff]
        %v277 = vld [vmem:[%s1 + $0x80] sm:$0xff]
        %v278 = vld [vmem:[%s1 + $0x88] sm:$0xff]
        %v279 = vld [vmem:[%s1 + $0x90] sm:$0xff]
        %v280 = vld [vmem:[%s1 + $0x98] sm:$0xff]
        %v281 = vld [vmem:[%s1 + $0xa0] sm:$0xff]
        %v282 = vld [vmem:[%s1 + $0xa8] sm:$0xff]
        %v283 = vld [vmem:[%s1 + $0xb0] sm:$0xff]
        %v284 = vld [vmem:[%s1 + $0xb8] sm:$0xff]
        %v285 = vld [vmem:[%s1 + $0xc0] sm:$0xff]
        %v286 = vld [vmem:[%s1 + $0xc8] sm:$0xff]
        %v287 = vld [vmem:[%s1 + $0xd0] sm:$0xff]
        %v288 = vld [vmem:[%s1 + $0xd8] sm:$0xff]
        %v289 = vld [vmem:[%s1 + $0xe0] sm:$0xff]
        %v290 = vld [vmem:[%s1 + $0xe8] sm:$0xff]
        %v291 = vld [vmem:[%s1 + $0xf0] sm:$0xff]
        %v292 = vld [vmem:[%s1 + $0xf8] sm:$0xff]
        %v293 = vld [vmem:[%s1 + $0x100] sm:$0xff]
        %v294 = vld [vmem:[%s1 + $0x108] sm:$0xff]
        %v295 = vld [vmem:[%s1 + $0x110] sm:$0xff]
        %v296 = vld [vmem:[%s1 + $0x118] sm:$0xff]
        %v297 = vld [vmem:[%s1 + $0x120] sm:$0xff]
        %v298 = vld [vmem:[%s1 + $0x128] sm:$0xff]
        %v299 = vld [vmem:[%s1 + $0x130] sm:$0xff]
        %v300 = vld [vmem:[%s1 + $0x138] sm:$0xff]
        %v301 = vld [vmem:[%s1 + $0x140] sm:$0xff]
        %v302 = vld [vmem:[%s1 + $0x148] sm:$0xff]
        %v303 = vld [vmem:[%s1 + $0x150] sm:$0xff]
        %v304 = vld [vmem:[%s1 + $0x158] sm:$0xff]
        %v305 = vld [vmem:[%s1 + $0x160] sm:$0xff]
        %v306 = vld [vmem:[%s1 + $0x168] sm:$0xff]
        %v307 = vld [vmem:[%s1 + $0x170] sm:$0xff]
        %v308 = vld [vmem:[%s1 + $0x178] sm:$0xff]
        %v309 = vld [vmem:[%s1 + $0x180] sm:$0xff]
        %v310 = vld [vmem:[%s1 + $0x188] sm:$0xff]
        %v311 = vld [vmem:[%s1 + $0x190] sm:$0xff]
        %v312 = vld [vmem:[%s1 + $0x198] sm:$0xff]
        %v313 = vld [vmem:[%s1 + $0x1a0] sm:$0xff]
        %v314 = vld [vmem:[%s1 + $0x1a8] sm:$0xff]
        %v315 = vld [vmem:[%s1 + $0x1b0] sm:$0xff]
        %v316 = vld [vmem:[%s1 + $0x1b8] sm:$0xff]
        %v317 = vld [vmem:[%s1 + $0x1c0] sm:$0xff]
        %v318 = vld [vmem:[%s1 + $0x1c8] sm:$0xff]
        %v319 = vld [vmem:[%s1 + $0x1d0] sm:$0xff]
        %v320 = vld [vmem:[%s1 + $0x1d8] sm:$0xff]
        %v321 = vld [vmem:[%s1 + $0x1e0] sm:$0xff]
        %v322 = vld [vmem:[%s1 + $0x1e8] sm:$0xff]
        %v323 = vld [vmem:[%s1 + $0x1f0] sm:$0xff]
        %v324 = vld [vmem:[%s1 + $0x1f8] sm:$0xff]
        %v325 = vld [vmem:[%s1 + $0x200] sm:$0xff]
        %v326 = vld [vmem:[%s1 + $0x208] sm:$0xff]
        %v327 = vld [vmem:[%s1 + $0x210] sm:$0xff]
        %v328 = vld [vmem:[%s1 + $0x218] sm:$0xff]
        %v329 = vld [vmem:[%s1 + $0x220] sm:$0xff]
        %v330 = vld [vmem:[%s1 + $0x228] sm:$0xff]
        %v331 = vld [vmem:[%s1 + $0x230] sm:$0xff]
        %v332 = vld [vmem:[%s1 + $0x238] sm:$0xff]
        %v333 = vld [vmem:[%s1 + $0x240] sm:$0xff]
        %v334 = vld [vmem:[%s1 + $0x248] sm:$0xff]
        %v335 = vld [vmem:[%s1 + $0x250] sm:$0xff]
        %v336 = vld [vmem:[%s1 + $0x258] sm:$0xff]
        %v337 = vld [vmem:[%s1 + $0x260] sm:$0xff]
        %v338 = vld [vmem:[%s1 + $0x268] sm:$0xff]
        %v339 = vld [vmem:[%s1 + $0x270] sm:$0xff]
        %v340 = vld [vmem:[%s1 + $0x278] sm:$0xff]
        %v341 = vld [vmem:[%s1 + $0x280] sm:$0xff]
        %v342 = vld [vmem:[%s1 + $0x288] sm:$0xff]
        %v343 = vld [vmem:[%s1 + $0x290] sm:$0xff]
        %v344 = vld [vmem:[%s1 + $0x298] sm:$0xff]
        %v345 = vld [vmem:[%s1 + $0x2a0] sm:$0xff]
        %v346 = vld [vmem:[%s1 + $0x2a8] sm:$0xff]
        %v347 = vld [vmem:[%s1 + $0x2b0] sm:$0xff]
        %v348 = vld [vmem:[%s1 + $0x2b8] sm:$0xff]
        %v349 = vld [vmem:[%s1 + $0x2c0] sm:$0xff]
        %v350 = vld [vmem:[%s1 + $0x2c8] sm:$0xff]
        %v351 = vld [vmem:[%s1 + $0x2d0] sm:$0xff]
        %v352 = vld [vmem:[%s1 + $0x2d8] sm:$0xff]
        %v353 = vld [vmem:[%s1 + $0x2e0] sm:$0xff]
        %v354 = vld [vmem:[%s1 + $0x2e8] sm:$0xff]
        %v355 = vld [vmem:[%s1 + $0x2f0] sm:$0xff]
        %v356 = vld [vmem:[%s1 + $0x2f8] sm:$0xff]
        %v357 = vld [vmem:[%s1 + $0x300] sm:$0xff]
        %v358 = vld [vmem:[%s1 + $0x308] sm:$0xff]
        %v359 = vld [vmem:[%s1 + $0x310] sm:$0xff]
        %v360 = vld [vmem:[%s1 + $0x318] sm:$0xff]
        %v361 = vld [vmem:[%s1 + $0x320] sm:$0xff]
        %v362 = vld [vmem:[%s1 + $0x328] sm:$0xff]
        %v363 = vld [vmem:[%s1 + $0x330] sm:$0xff]
        %v364 = vld [vmem:[%s1 + $0x338] sm:$0xff]
        %v365 = vld [vmem:[%s1 + $0x340] sm:$0xff]
        %v366 = vld [vmem:[%s1 + $0x348] sm:$0xff]
        %v367 = vld [vmem:[%s1 + $0x350] sm:$0xff]
        %v368 = vld [vmem:[%s1 + $0x358] sm:$0xff]
        %v369 = vld [vmem:[%s1 + $0x360] sm:$0xff]
        %v370 = vld [vmem:[%s1 + $0x368] sm:$0xff]
        %v371 = vld [vmem:[%s1 + $0x370] sm:$0xff]
        %v372 = vld [vmem:[%s1 + $0x378] sm:$0xff]
        %v373 = vld [vmem:[%s1 + $0x380] sm:$0xff]
        %v374 = vld [vmem:[%s1 + $0x388] sm:$0xff]
        %v375 = vld [vmem:[%s1 + $0x390] sm:$0xff]
        %v376 = vld [vmem:[%s1 + $0x398] sm:$0xff]
        %v377 = vld [vmem:[%s1 + $0x3a0] sm:$0xff]
        %v378 = vld [vmem:[%s1 + $0x3a8] sm:$0xff]
        %v379 = vld [vmem:[%s1 + $0x3b0] sm:$0xff]
        %v380 = vld [vmem:[%s1 + $0x3b8] sm:$0xff]
        %v381 = vld [vmem:[%s1 + $0x3c0] sm:$0xff]
        %v382 = vld [vmem:[%s1 + $0x3c8] sm:$0xff]
        %v383 = vld [vmem:[%s1 + $0x3d0] sm:$0xff]
        %v384 = vld [vmem:[%s1 + $0x3d8] sm:$0xff]
        %v385 = vld [vmem:[%s1 + $0x3e0] sm:$0xff]
        %v386 = vld [vmem:[%s1 + $0x3e8] sm:$0xff]
        %v387 = vld [vmem:[%s1 + $0x3f0] sm:$0xff]
        %v388 = vld [vmem:[%s1 + $0x3f8] sm:$0xff]
        %v389 = vld [vmem:[#allocation2] sm:$0xf]
        %v391 = vlaneseq
        %v392 = vshrl.u32 %v391, 7
        %v393 = vsub.s32 0, %v392
        %v394 = vrot.slane %v389, %v393
        %v395 = vlaneseq
        %v396 = vshrl.u32 %v395, 7
        %v397 = vsub.s32 1, %v396
        %v398 = vrot.slane %v389, %v397
        %v399 = vlaneseq
        %v400 = vshrl.u32 %v399, 7
        %v401 = vsub.s32 2, %v400
        %v402 = vrot.slane %v389, %v401
        %v403 = vlaneseq
        %v404 = vshrl.u32 %v403, 7
        %v405 = vsub.s32 3, %v404
        %v406 = vrot.slane %v389, %v405
        %v539 = vunpack.c.l.b16 %v261
        %v540 = vunpack.c.h.b16 %v261
        %v541 = vunpack.c.l.b16 %v262
        %v542 = vunpack.c.h.b16 %v262
        %v543 = vunpack.c.l.b16 %v263
        %v544 = vunpack.c.h.b16 %v263
        %v545 = vunpack.c.l.b16 %v264
        %v546 = vunpack.c.h.b16 %v264
        %v547 = vunpack.c.l.b16 %v265
        %v548 = vunpack.c.h.b16 %v265
        %v549 = vunpack.c.l.b16 %v266
        %v550 = vunpack.c.h.b16 %v266
        %v551 = vunpack.c.l.b16 %v267
        %v552 = vunpack.c.h.b16 %v267
        %v553 = vunpack.c.l.b16 %v268
        %v554 = vunpack.c.h.b16 %v268
        %v555 = vunpack.c.l.b16 %v269
        %v556 = vunpack.c.h.b16 %v269
        %v557 = vunpack.c.l.b16 %v270
        %v558 = vunpack.c.h.b16 %v270
        %v559 = vunpack.c.l.b16 %v271
        %v560 = vunpack.c.h.b16 %v271
        %v561 = vunpack.c.l.b16 %v272
        %v562 = vunpack.c.h.b16 %v272
        %v563 = vunpack.c.l.b16 %v273
        %v564 = vunpack.c.h.b16 %v273
        %v565 = vunpack.c.l.b16 %v274
        %v566 = vunpack.c.h.b16 %v274
        %v567 = vunpack.c.l.b16 %v275
        %v568 = vunpack.c.h.b16 %v275
        %v569 = vunpack.c.l.b16 %v276
        %v570 = vunpack.c.h.b16 %v276
        %v571 = vunpack.c.l.b16 %v277
        %v572 = vunpack.c.h.b16 %v277
        %v573 = vunpack.c.l.b16 %v278
        %v574 = vunpack.c.h.b16 %v278
        %v575 = vunpack.c.l.b16 %v279
        %v576 = vunpack.c.h.b16 %v279
        %v577 = vunpack.c.l.b16 %v280
        %v578 = vunpack.c.h.b16 %v280
        %v579 = vunpack.c.l.b16 %v281
        %v580 = vunpack.c.h.b16 %v281
        %v581 = vunpack.c.l.b16 %v282
        %v582 = vunpack.c.h.b16 %v282
        %v583 = vunpack.c.l.b16 %v283
        %v584 = vunpack.c.h.b16 %v283
        %v585 = vunpack.c.l.b16 %v284
        %v586 = vunpack.c.h.b16 %v284
        %v587 = vunpack.c.l.b16 %v285
        %v588 = vunpack.c.h.b16 %v285
        %v589 = vunpack.c.l.b16 %v286
        %v590 = vunpack.c.h.b16 %v286
        %v591 = vunpack.c.l.b16 %v287
        %v592 = vunpack.c.h.b16 %v287
        %v593 = vunpack.c.l.b16 %v288
        %v594 = vunpack.c.h.b16 %v288
        %v595 = vunpack.c.l.b16 %v289
        %v596 = vunpack.c.h.b16 %v289
        %v597 = vunpack.c.l.b16 %v290
        %v598 = vunpack.c.h.b16 %v290
        %v599 = vunpack.c.l.b16 %v291
        %v600 = vunpack.c.h.b16 %v291
        %v601 = vunpack.c.l.b16 %v292
        %v602 = vunpack.c.h.b16 %v292
        %v603 = vunpack.c.l.b16 %v293
        %v604 = vunpack.c.h.b16 %v293
        %v605 = vunpack.c.l.b16 %v294
        %v606 = vunpack.c.h.b16 %v294
        %v607 = vunpack.c.l.b16 %v295
        %v608 = vunpack.c.h.b16 %v295
        %v609 = vunpack.c.l.b16 %v296
        %v610 = vunpack.c.h.b16 %v296
        %v611 = vunpack.c.l.b16 %v297
        %v612 = vunpack.c.h.b16 %v297
        %v613 = vunpack.c.l.b16 %v298
        %v614 = vunpack.c.h.b16 %v298
        %v615 = vunpack.c.l.b16 %v299
        %v616 = vunpack.c.h.b16 %v299
        %v617 = vunpack.c.l.b16 %v300
        %v618 = vunpack.c.h.b16 %v300
        %v619 = vunpack.c.l.b16 %v301
        %v620 = vunpack.c.h.b16 %v301
        %v621 = vunpack.c.l.b16 %v302
        %v622 = vunpack.c.h.b16 %v302
        %v623 = vunpack.c.l.b16 %v303
        %v624 = vunpack.c.h.b16 %v303
        %v625 = vunpack.c.l.b16 %v304
        %v626 = vunpack.c.h.b16 %v304
        %v627 = vunpack.c.l.b16 %v305
        %v628 = vunpack.c.h.b16 %v305
        %v629 = vunpack.c.l.b16 %v306
        %v630 = vunpack.c.h.b16 %v306
        %v631 = vunpack.c.l.b16 %v307
        %v632 = vunpack.c.h.b16 %v307
        %v633 = vunpack.c.l.b16 %v308
        %v634 = vunpack.c.h.b16 %v308
        %v635 = vunpack.c.l.b16 %v309
        %v636 = vunpack.c.h.b16 %v309
        %v637 = vunpack.c.l.b16 %v310
        %v638 = vunpack.c.h.b16 %v310
        %v639 = vunpack.c.l.b16 %v311
        %v640 = vunpack.c.h.b16 %v311
        %v641 = vunpack.c.l.b16 %v312
        %v642 = vunpack.c.h.b16 %v312
        %v643 = vunpack.c.l.b16 %v313
        %v644 = vunpack.c.h.b16 %v313
        %v645 = vunpack.c.l.b16 %v314
        %v646 = vunpack.c.h.b16 %v314
        %v647 = vunpack.c.l.b16 %v315
        %v648 = vunpack.c.h.b16 %v315
        %v649 = vunpack.c.l.b16 %v316
        %v650 = vunpack.c.h.b16 %v316
        %v651 = vunpack.c.l.b16 %v317
        %v652 = vunpack.c.h.b16 %v317
        %v653 = vunpack.c.l.b16 %v318
        %v654 = vunpack.c.h.b16 %v318
        %v655 = vunpack.c.l.b16 %v319
        %v656 = vunpack.c.h.b16 %v319
        %v657 = vunpack.c.l.b16 %v320
        %v658 = vunpack.c.h.b16 %v320
        %v659 = vunpack.c.l.b16 %v321
        %v660 = vunpack.c.h.b16 %v321
        %v661 = vunpack.c.l.b16 %v322
        %v662 = vunpack.c.h.b16 %v322
        %v663 = vunpack.c.l.b16 %v323
        %v664 = vunpack.c.h.b16 %v323
        %v665 = vunpack.c.l.b16 %v324
        %v666 = vunpack.c.h.b16 %v324
        %v667 = vunpack.c.l.b16 %v325
        %v668 = vunpack.c.h.b16 %v325
        %v669 = vunpack.c.l.b16 %v326
        %v670 = vunpack.c.h.b16 %v326
        %v671 = vunpack.c.l.b16 %v327
        %v672 = vunpack.c.h.b16 %v327
        %v673 = vunpack.c.l.b16 %v328
        %v674 = vunpack.c.h.b16 %v328
        %v675 = vunpack.c.l.b16 %v329
        %v676 = vunpack.c.h.b16 %v329
        %v677 = vunpack.c.l.b16 %v330
        %v678 = vunpack.c.h.b16 %v330
        %v679 = vunpack.c.l.b16 %v331
        %v680 = vunpack.c.h.b16 %v331
        %v681 = vunpack.c.l.b16 %v332
        %v682 = vunpack.c.h.b16 %v332
        %v683 = vunpack.c.l.b16 %v333
        %v684 = vunpack.c.h.b16 %v333
        %v685 = vunpack.c.l.b16 %v334
        %v686 = vunpack.c.h.b16 %v334
        %v687 = vunpack.c.l.b16 %v335
        %v688 = vunpack.c.h.b16 %v335
        %v689 = vunpack.c.l.b16 %v336
        %v690 = vunpack.c.h.b16 %v336
        %v691 = vunpack.c.l.b16 %v337
        %v692 = vunpack.c.h.b16 %v337
        %v693 = vunpack.c.l.b16 %v338
        %v694 = vunpack.c.h.b16 %v338
        %v695 = vunpack.c.l.b16 %v339
        %v696 = vunpack.c.h.b16 %v339
        %v697 = vunpack.c.l.b16 %v340
        %v698 = vunpack.c.h.b16 %v340
        %v699 = vunpack.c.l.b16 %v341
        %v700 = vunpack.c.h.b16 %v341
        %v701 = vunpack.c.l.b16 %v342
        %v702 = vunpack.c.h.b16 %v342
        %v703 = vunpack.c.l.b16 %v343
        %v704 = vunpack.c.h.b16 %v343
        %v705 = vunpack.c.l.b16 %v344
        %v706 = vunpack.c.h.b16 %v344
        %v707 = vunpack.c.l.b16 %v345
        %v708 = vunpack.c.h.b16 %v345
        %v709 = vunpack.c.l.b16 %v346
        %v710 = vunpack.c.h.b16 %v346
        %v711 = vunpack.c.l.b16 %v347
        %v712 = vunpack.c.h.b16 %v347
        %v713 = vunpack.c.l.b16 %v348
        %v714 = vunpack.c.h.b16 %v348
        %v715 = vunpack.c.l.b16 %v349
        %v716 = vunpack.c.h.b16 %v349
        %v717 = vunpack.c.l.b16 %v350
        %v718 = vunpack.c.h.b16 %v350
        %v719 = vunpack.c.l.b16 %v351
        %v720 = vunpack.c.h.b16 %v351
        %v721 = vunpack.c.l.b16 %v352
        %v722 = vunpack.c.h.b16 %v352
        %v723 = vunpack.c.l.b16 %v353
        %v724 = vunpack.c.h.b16 %v353
        %v725 = vunpack.c.l.b16 %v354
        %v726 = vunpack.c.h.b16 %v354
        %v727 = vunpack.c.l.b16 %v355
        %v728 = vunpack.c.h.b16 %v355
        %v729 = vunpack.c.l.b16 %v356
        %v730 = vunpack.c.h.b16 %v356
        %v731 = vunpack.c.l.b16 %v357
        %v732 = vunpack.c.h.b16 %v357
        %v733 = vunpack.c.l.b16 %v358
        %v734 = vunpack.c.h.b16 %v358
        %v735 = vunpack.c.l.b16 %v359
        %v736 = vunpack.c.h.b16 %v359
        %v737 = vunpack.c.l.b16 %v360
        %v738 = vunpack.c.h.b16 %v360
        %v739 = vunpack.c.l.b16 %v361
        %v740 = vunpack.c.h.b16 %v361
        %v741 = vunpack.c.l.b16 %v362
        %v742 = vunpack.c.h.b16 %v362
        %v743 = vunpack.c.l.b16 %v363
        %v744 = vunpack.c.h.b16 %v363
        %v745 = vunpack.c.l.b16 %v364
        %v746 = vunpack.c.h.b16 %v364
        %v747 = vunpack.c.l.b16 %v365
        %v748 = vunpack.c.h.b16 %v365
        %v749 = vunpack.c.l.b16 %v366
        %v750 = vunpack.c.h.b16 %v366
        %v751 = vunpack.c.l.b16 %v367
        %v752 = vunpack.c.h.b16 %v367
        %v753 = vunpack.c.l.b16 %v368
        %v754 = vunpack.c.h.b16 %v368
        %v755 = vunpack.c.l.b16 %v369
        %v756 = vunpack.c.h.b16 %v369
        %v757 = vunpack.c.l.b16 %v370
        %v758 = vunpack.c.h.b16 %v370
        %v759 = vunpack.c.l.b16 %v371
        %v760 = vunpack.c.h.b16 %v371
        %v761 = vunpack.c.l.b16 %v372
        %v762 = vunpack.c.h.b16 %v372
        %v763 = vunpack.c.l.b16 %v373
        %v764 = vunpack.c.h.b16 %v373
        %v765 = vunpack.c.l.b16 %v374
        %v766 = vunpack.c.h.b16 %v374
        %v767 = vunpack.c.l.b16 %v375
        %v768 = vunpack.c.h.b16 %v375
        %v769 = vunpack.c.l.b16 %v376
        %v770 = vunpack.c.h.b16 %v376
        %v771 = vunpack.c.l.b16 %v377
        %v772 = vunpack.c.h.b16 %v377
        %v773 = vunpack.c.l.b16 %v378
        %v774 = vunpack.c.h.b16 %v378
        %v775 = vunpack.c.l.b16 %v379
        %v776 = vunpack.c.h.b16 %v379
        %v777 = vunpack.c.l.b16 %v380
        %v778 = vunpack.c.h.b16 %v380
        %v779 = vunpack.c.l.b16 %v381
        %v780 = vunpack.c.h.b16 %v381
        %v781 = vunpack.c.l.b16 %v382
        %v782 = vunpack.c.h.b16 %v382
        %v783 = vunpack.c.l.b16 %v383
        %v784 = vunpack.c.h.b16 %v383
        %v785 = vunpack.c.l.b16 %v384
        %v786 = vunpack.c.h.b16 %v384
        %v787 = vunpack.c.l.b16 %v385
        %v788 = vunpack.c.h.b16 %v385
        %v789 = vunpack.c.l.b16 %v386
        %v790 = vunpack.c.h.b16 %v386
        %v791 = vunpack.c.l.b16 %v387
        %v792 = vunpack.c.h.b16 %v387
        %v793 = vunpack.c.l.b16 %v388
        %v794 = vunpack.c.h.b16 %v388
        %v795 = vpack.c.b16 %v543, %v539
        %v796 = vpack.c.b16 %v544, %v540
        %v797 = vpack.c.b16 %v545, %v541
        %v798 = vpack.c.b16 %v546, %v542
        %v799 = vpack.c.b16 %v551, %v547
        %v800 = vpack.c.b16 %v552, %v548
        %v801 = vpack.c.b16 %v553, %v549
        %v802 = vpack.c.b16 %v554, %v550
        %v803 = vpack.c.b16 %v559, %v555
        %v804 = vpack.c.b16 %v560, %v556
        %v805 = vpack.c.b16 %v561, %v557
        %v806 = vpack.c.b16 %v562, %v558
        %v807 = vpack.c.b16 %v567, %v563
        %v808 = vpack.c.b16 %v568, %v564
        %v809 = vpack.c.b16 %v569, %v565
        %v810 = vpack.c.b16 %v570, %v566
        %v811 = vpack.c.b16 %v575, %v571
        %v812 = vpack.c.b16 %v576, %v572
        %v813 = vpack.c.b16 %v577, %v573
        %v814 = vpack.c.b16 %v578, %v574
        %v815 = vpack.c.b16 %v583, %v579
        %v816 = vpack.c.b16 %v584, %v580
        %v817 = vpack.c.b16 %v585, %v581
        %v818 = vpack.c.b16 %v586, %v582
        %v819 = vpack.c.b16 %v591, %v587
        %v820 = vpack.c.b16 %v592, %v588
        %v821 = vpack.c.b16 %v593, %v589
        %v822 = vpack.c.b16 %v594, %v590
        %v823 = vpack.c.b16 %v599, %v595
        %v824 = vpack.c.b16 %v600, %v596
        %v825 = vpack.c.b16 %v601, %v597
        %v826 = vpack.c.b16 %v602, %v598
        %v827 = vpack.c.b16 %v607, %v603
        %v828 = vpack.c.b16 %v608, %v604
        %v829 = vpack.c.b16 %v609, %v605
        %v830 = vpack.c.b16 %v610, %v606
        %v831 = vpack.c.b16 %v615, %v611
        %v832 = vpack.c.b16 %v616, %v612
        %v833 = vpack.c.b16 %v617, %v613
        %v834 = vpack.c.b16 %v618, %v614
        %v835 = vpack.c.b16 %v623, %v619
        %v836 = vpack.c.b16 %v624, %v620
        %v837 = vpack.c.b16 %v625, %v621
        %v838 = vpack.c.b16 %v626, %v622
        %v839 = vpack.c.b16 %v631, %v627
        %v840 = vpack.c.b16 %v632, %v628
        %v841 = vpack.c.b16 %v633, %v629
        %v842 = vpack.c.b16 %v634, %v630
        %v843 = vpack.c.b16 %v639, %v635
        %v844 = vpack.c.b16 %v640, %v636
        %v845 = vpack.c.b16 %v641, %v637
        %v846 = vpack.c.b16 %v642, %v638
        %v847 = vpack.c.b16 %v647, %v643
        %v848 = vpack.c.b16 %v648, %v644
        %v849 = vpack.c.b16 %v649, %v645
        %v850 = vpack.c.b16 %v650, %v646
        %v851 = vpack.c.b16 %v655, %v651
        %v852 = vpack.c.b16 %v656, %v652
        %v853 = vpack.c.b16 %v657, %v653
        %v854 = vpack.c.b16 %v658, %v654
        %v855 = vpack.c.b16 %v663, %v659
        %v856 = vpack.c.b16 %v664, %v660
        %v857 = vpack.c.b16 %v665, %v661
        %v858 = vpack.c.b16 %v666, %v662
        %v859 = vpack.c.b16 %v671, %v667
        %v860 = vpack.c.b16 %v672, %v668
        %v861 = vpack.c.b16 %v673, %v669
        %v862 = vpack.c.b16 %v674, %v670
        %v863 = vpack.c.b16 %v679, %v675
        %v864 = vpack.c.b16 %v680, %v676
        %v865 = vpack.c.b16 %v681, %v677
        %v866 = vpack.c.b16 %v682, %v678
        %v867 = vpack.c.b16 %v687, %v683
        %v868 = vpack.c.b16 %v688, %v684
        %v869 = vpack.c.b16 %v689, %v685
        %v870 = vpack.c.b16 %v690, %v686
        %v871 = vpack.c.b16 %v695, %v691
        %v872 = vpack.c.b16 %v696, %v692
        %v873 = vpack.c.b16 %v697, %v693
        %v874 = vpack.c.b16 %v698, %v694
        %v875 = vpack.c.b16 %v703, %v699
        %v876 = vpack.c.b16 %v704, %v700
        %v877 = vpack.c.b16 %v705, %v701
        %v878 = vpack.c.b16 %v706, %v702
        %v879 = vpack.c.b16 %v711, %v707
        %v880 = vpack.c.b16 %v712, %v708
        %v881 = vpack.c.b16 %v713, %v709
        %v882 = vpack.c.b16 %v714, %v710
        %v883 = vpack.c.b16 %v719, %v715
        %v884 = vpack.c.b16 %v720, %v716
        %v885 = vpack.c.b16 %v721, %v717
        %v886 = vpack.c.b16 %v722, %v718
        %v887 = vpack.c.b16 %v727, %v723
        %v888 = vpack.c.b16 %v728, %v724
        %v889 = vpack.c.b16 %v729, %v725
        %v890 = vpack.c.b16 %v730, %v726
        %v891 = vpack.c.b16 %v735, %v731
        %v892 = vpack.c.b16 %v736, %v732
        %v893 = vpack.c.b16 %v737, %v733
        %v894 = vpack.c.b16 %v738, %v734
        %v895 = vpack.c.b16 %v743, %v739
        %v896 = vpack.c.b16 %v744, %v740
        %v897 = vpack.c.b16 %v745, %v741
        %v898 = vpack.c.b16 %v746, %v742
        %v899 = vpack.c.b16 %v751, %v747
        %v900 = vpack.c.b16 %v752, %v748
        %v901 = vpack.c.b16 %v753, %v749
        %v902 = vpack.c.b16 %v754, %v750
        %v903 = vpack.c.b16 %v759, %v755
        %v904 = vpack.c.b16 %v760, %v756
        %v905 = vpack.c.b16 %v761, %v757
        %v906 = vpack.c.b16 %v762, %v758
        %v907 = vpack.c.b16 %v767, %v763
        %v908 = vpack.c.b16 %v768, %v764
        %v909 = vpack.c.b16 %v769, %v765
        %v910 = vpack.c.b16 %v770, %v766
        %v911 = vpack.c.b16 %v775, %v771
        %v912 = vpack.c.b16 %v776, %v772
        %v913 = vpack.c.b16 %v777, %v773
        %v914 = vpack.c.b16 %v778, %v774
        %v915 = vpack.c.b16 %v783, %v779
        %v916 = vpack.c.b16 %v784, %v780
        %v917 = vpack.c.b16 %v785, %v781
        %v918 = vpack.c.b16 %v786, %v782
        %v919 = vpack.c.b16 %v791, %v787
        %v920 = vpack.c.b16 %v792, %v788
        %v921 = vpack.c.b16 %v793, %v789
        %v922 = vpack.c.b16 %v794, %v790
        %1051 = vmatprep.subr.bf16.mxu0 %v796
        %1052 = vmatpush1.bf16.msra.mxu0 %v795
        %1053 = vmatprep.subr.bf16.mxu0 %v800
        %1054 = vmatpush1.bf16.msra.mxu0 %v799
        %1055 = vmatprep.subr.bf16.mxu0 %v804
        %1056 = vmatpush1.bf16.msra.mxu0 %v803
        %1057 = vmatprep.subr.bf16.mxu0 %v808
        %1058 = vmatpush1.bf16.msra.mxu0 %v807
        %1059 = vmatprep.subr.bf16.mxu0 %v812
        %1060 = vmatpush1.bf16.msra.mxu0 %v811
        %1061 = vmatprep.subr.bf16.mxu0 %v816
        %1062 = vmatpush1.bf16.msra.mxu0 %v815
        %1063 = vmatprep.subr.bf16.mxu0 %v820
        %1064 = vmatpush1.bf16.msra.mxu0 %v819
        %1065 = vmatprep.subr.bf16.mxu0 %v824
        %1066 = vmatpush1.bf16.msra.mxu0 %v823
        %1067 = vmatprep.subr.bf16.mxu0 %v828
        %1068 = vmatpush1.bf16.msra.mxu0 %v827
        %1069 = vmatprep.subr.bf16.mxu0 %v832
        %1070 = vmatpush1.bf16.msra.mxu0 %v831
        %1071 = vmatprep.subr.bf16.mxu0 %v836
        %1072 = vmatpush1.bf16.msra.mxu0 %v835
        %1073 = vmatprep.subr.bf16.mxu0 %v840
        %1074 = vmatpush1.bf16.msra.mxu0 %v839
        %1075 = vmatprep.subr.bf16.mxu0 %v844
        %1076 = vmatpush1.bf16.msra.mxu0 %v843
        %1077 = vmatprep.subr.bf16.mxu0 %v848
        %1078 = vmatpush1.bf16.msra.mxu0 %v847
        %1079 = vmatprep.subr.bf16.mxu0 %v852
        %1080 = vmatpush1.bf16.msra.mxu0 %v851
        %1081 = vmatprep.subr.bf16.mxu0 %v856
        %1082 = vmatpush1.bf16.msra.mxu0 %v855
        %1083 = vmatprep.mubr.bf16.mxu0 %v258
        %1084 = vmatmul.mubr.bf16.gmra.mrb[0].mxu0 %v257
        %v1085 = vpop.f32.mrb[0].mxu0
        %v1086 = vadd.f32 %v394, %v1085
        %v1087 = vpop.f32.mrb[0].mxu0
        %v1088 = vadd.f32 %v398, %v1087
        %v1089 = vpop.f32.mrb[0].mxu0
        %v1090 = vpop.f32.mrb[0].mxu0
        %1091 = vdwg.mxu0
        %1092 = vmatprep.subr.bf16.mxu0 %v860
        %1093 = vmatpush1.bf16.msra.mxu0 %v859
        %1094 = vmatprep.subr.bf16.mxu0 %v864
        %1095 = vmatpush1.bf16.msra.mxu0 %v863
        %1096 = vmatprep.subr.bf16.mxu0 %v868
        %1097 = vmatpush1.bf16.msra.mxu0 %v867
        %1098 = vmatprep.subr.bf16.mxu0 %v872
        %1099 = vmatpush1.bf16.msra.mxu0 %v871
        %1100 = vmatprep.subr.bf16.mxu0 %v876
        %1101 = vmatpush1.bf16.msra.mxu0 %v875
        %1102 = vmatprep.subr.bf16.mxu0 %v880
        %1103 = vmatpush1.bf16.msra.mxu0 %v879
        %1104 = vmatprep.subr.bf16.mxu0 %v884
        %1105 = vmatpush1.bf16.msra.mxu0 %v883
        %1106 = vmatprep.subr.bf16.mxu0 %v888
        %1107 = vmatpush1.bf16.msra.mxu0 %v887
        %1108 = vmatprep.subr.bf16.mxu0 %v892
        %1109 = vmatpush1.bf16.msra.mxu0 %v891
        %1110 = vmatprep.subr.bf16.mxu0 %v896
        %1111 = vmatpush1.bf16.msra.mxu0 %v895
        %1112 = vmatprep.subr.bf16.mxu0 %v900
        %1113 = vmatpush1.bf16.msra.mxu0 %v899
        %1114 = vmatprep.subr.bf16.mxu0 %v904
        %1115 = vmatpush1.bf16.msra.mxu0 %v903
        %1116 = vmatprep.subr.bf16.mxu0 %v908
        %1117 = vmatpush1.bf16.msra.mxu0 %v907
        %1118 = vmatprep.subr.bf16.mxu0 %v912
        %1119 = vmatpush1.bf16.msra.mxu0 %v911
        %1120 = vmatprep.subr.bf16.mxu0 %v916
        %1121 = vmatpush1.bf16.msra.mxu0 %v915
        %1122 = vmatprep.subr.bf16.mxu0 %v920
        %1123 = vmatpush1.bf16.msra.mxu0 %v919
        %1124 = vmatprep.mubr.bf16.mxu0 %v260
        %1125 = vmatmul.mubr.bf16.gmra.mrb[0].mxu0 %v259
        %v1126 = vpop.f32.mrb[0].mxu0
        %v1127 = vadd.f32 %v1086, %v1126
        %v1128 = vpop.f32.mrb[0].mxu0
        %v1129 = vadd.f32 %v1088, %v1128
        %v1130 = vpop.f32.mrb[0].mxu0
        %v1131 = vpop.f32.mrb[0].mxu0
        %1132 = vdwg.mxu0
        %1133 = vmatprep.subr.bf16.mxu0 %v798
        %1134 = vmatpush1.bf16.msra.mxu0 %v797
        %1135 = vmatprep.subr.bf16.mxu0 %v802
        %1136 = vmatpush1.bf16.msra.mxu0 %v801
        %1137 = vmatprep.subr.bf16.mxu0 %v806
        %1138 = vmatpush1.bf16.msra.mxu0 %v805
        %1139 = vmatprep.subr.bf16.mxu0 %v810
        %1140 = vmatpush1.bf16.msra.mxu0 %v809
        %1141 = vmatprep.subr.bf16.mxu0 %v814
        %1142 = vmatpush1.bf16.msra.mxu0 %v813
        %1143 = vmatprep.subr.bf16.mxu0 %v818
        %1144 = vmatpush1.bf16.msra.mxu0 %v817
        %1145 = vmatprep.subr.bf16.mxu0 %v822
        %1146 = vmatpush1.bf16.msra.mxu0 %v821
        %1147 = vmatprep.subr.bf16.mxu0 %v826
        %1148 = vmatpush1.bf16.msra.mxu0 %v825
        %1149 = vmatprep.subr.bf16.mxu0 %v830
        %1150 = vmatpush1.bf16.msra.mxu0 %v829
        %1151 = vmatprep.subr.bf16.mxu0 %v834
        %1152 = vmatpush1.bf16.msra.mxu0 %v833
        %1153 = vmatprep.subr.bf16.mxu0 %v838
        %1154 = vmatpush1.bf16.msra.mxu0 %v837
        %1155 = vmatprep.subr.bf16.mxu0 %v842
        %1156 = vmatpush1.bf16.msra.mxu0 %v841
        %1157 = vmatprep.subr.bf16.mxu0 %v846
        %1158 = vmatpush1.bf16.msra.mxu0 %v845
        %1159 = vmatprep.subr.bf16.mxu0 %v850
        %1160 = vmatpush1.bf16.msra.mxu0 %v849
        %1161 = vmatprep.subr.bf16.mxu0 %v854
        %1162 = vmatpush1.bf16.msra.mxu0 %v853
        %1163 = vmatprep.subr.bf16.mxu0 %v858
        %1164 = vmatpush1.bf16.msra.mxu0 %v857
        %1165 = vmatprep.mubr.bf16.mxu0 %v258
        %1166 = vmatmul.mubr.bf16.gmra.mrb[0].mxu0 %v257
        %v1167 = vpop.f32.mrb[0].mxu0
        %v1168 = vadd.f32 %v402, %v1167
        %v1169 = vpop.f32.mrb[0].mxu0
        %v1170 = vadd.f32 %v406, %v1169
        %v1171 = vpop.f32.mrb[0].mxu0
        %v1172 = vpop.f32.mrb[0].mxu0
        %1173 = vdwg.mxu0
        %1174 = vmatprep.subr.bf16.mxu0 %v862
        %1175 = vmatpush1.bf16.msra.mxu0 %v861
        %1176 = vmatprep.subr.bf16.mxu0 %v866
        %1177 = vmatpush1.bf16.msra.mxu0 %v865
        %1178 = vmatprep.subr.bf16.mxu0 %v870
        %1179 = vmatpush1.bf16.msra.mxu0 %v869
        %1180 = vmatprep.subr.bf16.mxu0 %v874
        %1181 = vmatpush1.bf16.msra.mxu0 %v873
        %1182 = vmatprep.subr.bf16.mxu0 %v878
        %1183 = vmatpush1.bf16.msra.mxu0 %v877
        %1184 = vmatprep.subr.bf16.mxu0 %v882
        %1185 = vmatpush1.bf16.msra.mxu0 %v881
        %1186 = vmatprep.subr.bf16.mxu0 %v886
        %1187 = vmatpush1.bf16.msra.mxu0 %v885
        %1188 = vmatprep.subr.bf16.mxu0 %v890
        %1189 = vmatpush1.bf16.msra.mxu0 %v889
        %1190 = vmatprep.subr.bf16.mxu0 %v894
        %1191 = vmatpush1.bf16.msra.mxu0 %v893
        %1192 = vmatprep.subr.bf16.mxu0 %v898
        %1193 = vmatpush1.bf16.msra.mxu0 %v897
        %1194 = vmatprep.subr.bf16.mxu0 %v902
        %1195 = vmatpush1.bf16.msra.mxu0 %v901
        %1196 = vmatprep.subr.bf16.mxu0 %v906
        %1197 = vmatpush1.bf16.msra.mxu0 %v905
        %1198 = vmatprep.subr.bf16.mxu0 %v910
        %1199 = vmatpush1.bf16.msra.mxu0 %v909
        %1200 = vmatprep.subr.bf16.mxu0 %v914
        %1201 = vmatpush1.bf16.msra.mxu0 %v913
        %1202 = vmatprep.subr.bf16.mxu0 %v918
        %1203 = vmatpush1.bf16.msra.mxu0 %v917
        %1204 = vmatprep.subr.bf16.mxu0 %v922
        %1205 = vmatpush1.bf16.msra.mxu0 %v921
        %1206 = vmatprep.mubr.bf16.mxu0 %v260
        %1207 = vmatmul.mubr.bf16.gmra.mrb[0].mxu0 %v259
        %v1208 = vpop.f32.mrb[0].mxu0
        %v1209 = vadd.f32 %v1168, %v1208
        %v1210 = vpop.f32.mrb[0].mxu0
        %v1211 = vadd.f32 %v1170, %v1210
        %v1212 = vpop.f32.mrb[0].mxu0
        %v1213 = vpop.f32.mrb[0].mxu0
        %1214 = vdwg.mxu0
        %v1215 = vmax.f32 %v1127, 0.0
        %v1216 = vmax.f32 %v1129, 0.0
        %v1217 = vmax.f32 %v1209, 0.0
        %v1218 = vmax.f32 %v1211, 0.0
        %v1219 = vpack.c.bf16 %v1215, %v1215
        %v1220 = vpack.c.bf16 %v1216, %v1216
        %v1221 = vpack.c.bf16 %v1217, %v1217
        %v1222 = vpack.c.bf16 %v1218, %v1218
        %v1223 = vld [vmem:[#allocation4] sm:$0xff]
        %v1224 = vld [vmem:[#allocation4 + $0x8] sm:$0xff]
        %v1225 = vld [vmem:[#allocation4 + $0x10] sm:$0xff]
        %v1226 = vld [vmem:[#allocation4 + $0x18] sm:$0xff]
        %v1227 = vld [vmem:[#allocation4 + $0x20] sm:$0xff]
        %v1228 = vld [vmem:[#allocation4 + $0x28] sm:$0xff]
        %v1229 = vld [vmem:[#allocation4 + $0x30] sm:$0xff]
        %v1230 = vld [vmem:[#allocation4 + $0x38] sm:$0xff]
        %v1231 = vld [vmem:[#allocation4 + $0x40] sm:$0xff]
        %v1232 = vld [vmem:[#allocation4 + $0x48] sm:$0xff]
        %v1233 = vld [vmem:[#allocation4 + $0x50] sm:$0xff]
        %v1234 = vld [vmem:[#allocation4 + $0x58] sm:$0xff]
        %v1235 = vld [vmem:[#allocation4 + $0x60] sm:$0xff]
        %v1236 = vld [vmem:[#allocation4 + $0x68] sm:$0xff]
        %v1237 = vld [vmem:[#allocation4 + $0x70] sm:$0xff]
        %v1238 = vld [vmem:[#allocation4 + $0x78] sm:$0xff]
        %v1239 = vld [vmem:[#allocation4 + $0x80] sm:$0xff]
        %v1240 = vld [vmem:[#allocation4 + $0x88] sm:$0xff]
        %v1241 = vld [vmem:[#allocation4 + $0x90] sm:$0xff]
        %v1242 = vld [vmem:[#allocation4 + $0x98] sm:$0xff]
        %v1243 = vld [vmem:[#allocation4 + $0xa0] sm:$0xff]
        %v1244 = vld [vmem:[#allocation4 + $0xa8] sm:$0xff]
        %v1245 = vld [vmem:[#allocation4 + $0xb0] sm:$0xff]
        %v1246 = vld [vmem:[#allocation4 + $0xb8] sm:$0xff]
        %v1247 = vld [vmem:[#allocation4 + $0xc0] sm:$0xff]
        %v1248 = vld [vmem:[#allocation4 + $0xc8] sm:$0xff]
        %v1249 = vld [vmem:[#allocation4 + $0xd0] sm:$0xff]
        %v1250 = vld [vmem:[#allocation4 + $0xd8] sm:$0xff]
        %v1251 = vld [vmem:[#allocation4 + $0xe0] sm:$0xff]
        %v1252 = vld [vmem:[#allocation4 + $0xe8] sm:$0xff]
        %v1253 = vld [vmem:[#allocation4 + $0xf0] sm:$0xff]
        %v1254 = vld [vmem:[#allocation4 + $0xf8] sm:$0xff]
        %v1255 = vld [vmem:[#allocation4 + $0x100] sm:$0xff]
        %v1256 = vld [vmem:[#allocation4 + $0x108] sm:$0xff]
        %v1257 = vld [vmem:[#allocation4 + $0x110] sm:$0xff]
        %v1258 = vld [vmem:[#allocation4 + $0x118] sm:$0xff]
        %v1259 = vld [vmem:[#allocation4 + $0x120] sm:$0xff]
        %v1260 = vld [vmem:[#allocation4 + $0x128] sm:$0xff]
        %v1261 = vld [vmem:[#allocation4 + $0x130] sm:$0xff]
        %v1262 = vld [vmem:[#allocation4 + $0x138] sm:$0xff]
        %v1263 = vld [vmem:[#allocation4 + $0x140] sm:$0xff]
        %v1264 = vld [vmem:[#allocation4 + $0x148] sm:$0xff]
        %v1265 = vld [vmem:[#allocation4 + $0x150] sm:$0xff]
        %v1266 = vld [vmem:[#allocation4 + $0x158] sm:$0xff]
        %v1267 = vld [vmem:[#allocation4 + $0x160] sm:$0xff]
        %v1268 = vld [vmem:[#allocation4 + $0x168] sm:$0xff]
        %v1269 = vld [vmem:[#allocation4 + $0x170] sm:$0xff]
        %v1270 = vld [vmem:[#allocation4 + $0x178] sm:$0xff]
        %v1271 = vld [vmem:[#allocation4 + $0x180] sm:$0xff]
        %v1272 = vld [vmem:[#allocation4 + $0x188] sm:$0xff]
        %v1273 = vld [vmem:[#allocation4 + $0x190] sm:$0xff]
        %v1274 = vld [vmem:[#allocation4 + $0x198] sm:$0xff]
        %v1275 = vld [vmem:[#allocation4 + $0x1a0] sm:$0xff]
        %v1276 = vld [vmem:[#allocation4 + $0x1a8] sm:$0xff]
        %v1277 = vld [vmem:[#allocation4 + $0x1b0] sm:$0xff]
        %v1278 = vld [vmem:[#allocation4 + $0x1b8] sm:$0xff]
        %v1279 = vld [vmem:[#allocation4 + $0x1c0] sm:$0xff]
        %v1280 = vld [vmem:[#allocation4 + $0x1c8] sm:$0xff]
        %v1281 = vld [vmem:[#allocation4 + $0x1d0] sm:$0xff]
        %v1282 = vld [vmem:[#allocation4 + $0x1d8] sm:$0xff]
        %v1283 = vld [vmem:[#allocation4 + $0x1e0] sm:$0xff]
        %v1284 = vld [vmem:[#allocation4 + $0x1e8] sm:$0xff]
        %v1285 = vld [vmem:[#allocation4 + $0x1f0] sm:$0xff]
        %v1286 = vld [vmem:[#allocation4 + $0x1f8] sm:$0xff]
        %v1287 = vld [vmem:[#allocation4 + $0x200] sm:$0xff]
        %v1288 = vld [vmem:[#allocation4 + $0x208] sm:$0xff]
        %v1289 = vld [vmem:[#allocation4 + $0x210] sm:$0xff]
        %v1290 = vld [vmem:[#allocation4 + $0x218] sm:$0xff]
        %v1291 = vld [vmem:[#allocation4 + $0x220] sm:$0xff]
        %v1292 = vld [vmem:[#allocation4 + $0x228] sm:$0xff]
        %v1293 = vld [vmem:[#allocation4 + $0x230] sm:$0xff]
        %v1294 = vld [vmem:[#allocation4 + $0x238] sm:$0xff]
        %v1295 = vld [vmem:[#allocation4 + $0x240] sm:$0xff]
        %v1296 = vld [vmem:[#allocation4 + $0x248] sm:$0xff]
        %v1297 = vld [vmem:[#allocation4 + $0x250] sm:$0xff]
        %v1298 = vld [vmem:[#allocation4 + $0x258] sm:$0xff]
        %v1299 = vld [vmem:[#allocation4 + $0x260] sm:$0xff]
        %v1300 = vld [vmem:[#allocation4 + $0x268] sm:$0xff]
        %v1301 = vld [vmem:[#allocation4 + $0x270] sm:$0xff]
        %v1302 = vld [vmem:[#allocation4 + $0x278] sm:$0xff]
        %v1303 = vld [vmem:[#allocation4 + $0x280] sm:$0xff]
        %v1304 = vld [vmem:[#allocation4 + $0x288] sm:$0xff]
        %v1305 = vld [vmem:[#allocation4 + $0x290] sm:$0xff]
        %v1306 = vld [vmem:[#allocation4 + $0x298] sm:$0xff]
        %v1307 = vld [vmem:[#allocation4 + $0x2a0] sm:$0xff]
        %v1308 = vld [vmem:[#allocation4 + $0x2a8] sm:$0xff]
        %v1309 = vld [vmem:[#allocation4 + $0x2b0] sm:$0xff]
        %v1310 = vld [vmem:[#allocation4 + $0x2b8] sm:$0xff]
        %v1311 = vld [vmem:[#allocation4 + $0x2c0] sm:$0xff]
        %v1312 = vld [vmem:[#allocation4 + $0x2c8] sm:$0xff]
        %v1313 = vld [vmem:[#allocation4 + $0x2d0] sm:$0xff]
        %v1314 = vld [vmem:[#allocation4 + $0x2d8] sm:$0xff]
        %v1315 = vld [vmem:[#allocation4 + $0x2e0] sm:$0xff]
        %v1316 = vld [vmem:[#allocation4 + $0x2e8] sm:$0xff]
        %v1317 = vld [vmem:[#allocation4 + $0x2f0] sm:$0xff]
        %v1318 = vld [vmem:[#allocation4 + $0x2f8] sm:$0xff]
        %v1319 = vld [vmem:[#allocation4 + $0x300] sm:$0xff]
        %v1320 = vld [vmem:[#allocation4 + $0x308] sm:$0xff]
        %v1321 = vld [vmem:[#allocation4 + $0x310] sm:$0xff]
        %v1322 = vld [vmem:[#allocation4 + $0x318] sm:$0xff]
        %v1323 = vld [vmem:[#allocation4 + $0x320] sm:$0xff]
        %v1324 = vld [vmem:[#allocation4 + $0x328] sm:$0xff]
        %v1325 = vld [vmem:[#allocation4 + $0x330] sm:$0xff]
        %v1326 = vld [vmem:[#allocation4 + $0x338] sm:$0xff]
        %v1327 = vld [vmem:[#allocation4 + $0x340] sm:$0xff]
        %v1328 = vld [vmem:[#allocation4 + $0x348] sm:$0xff]
        %v1329 = vld [vmem:[#allocation4 + $0x350] sm:$0xff]
        %v1330 = vld [vmem:[#allocation4 + $0x358] sm:$0xff]
        %v1331 = vld [vmem:[#allocation4 + $0x360] sm:$0xff]
        %v1332 = vld [vmem:[#allocation4 + $0x368] sm:$0xff]
        %v1333 = vld [vmem:[#allocation4 + $0x370] sm:$0xff]
        %v1334 = vld [vmem:[#allocation4 + $0x378] sm:$0xff]
        %v1335 = vld [vmem:[#allocation4 + $0x380] sm:$0xff]
        %v1336 = vld [vmem:[#allocation4 + $0x388] sm:$0xff]
        %v1337 = vld [vmem:[#allocation4 + $0x390] sm:$0xff]
        %v1338 = vld [vmem:[#allocation4 + $0x398] sm:$0xff]
        %v1339 = vld [vmem:[#allocation4 + $0x3a0] sm:$0xff]
        %v1340 = vld [vmem:[#allocation4 + $0x3a8] sm:$0xff]
        %v1341 = vld [vmem:[#allocation4 + $0x3b0] sm:$0xff]
        %v1342 = vld [vmem:[#allocation4 + $0x3b8] sm:$0xff]
        %v1343 = vld [vmem:[#allocation4 + $0x3c0] sm:$0xff]
        %v1344 = vld [vmem:[#allocation4 + $0x3c8] sm:$0xff]
        %v1345 = vld [vmem:[#allocation4 + $0x3d0] sm:$0xff]
        %v1346 = vld [vmem:[#allocation4 + $0x3d8] sm:$0xff]
        %v1347 = vld [vmem:[#allocation4 + $0x3e0] sm:$0xff]
        %v1348 = vld [vmem:[#allocation4 + $0x3e8] sm:$0xff]
        %v1349 = vld [vmem:[#allocation4 + $0x3f0] sm:$0xff]
        %v1350 = vld [vmem:[#allocation4 + $0x3f8] sm:$0xff]
        %v1351 = vld [vmem:[%s4] sm:$0xf]
        %v1353 = vlaneseq
        %v1354 = vshrl.u32 %v1353, 7
        %v1355 = vsub.s32 0, %v1354
        %v1356 = vrot.slane %v1351, %v1355
        %v1357 = vlaneseq
        %v1358 = vshrl.u32 %v1357, 7
        %v1359 = vsub.s32 1, %v1358
        %v1360 = vrot.slane %v1351, %v1359
        %v1361 = vlaneseq
        %v1362 = vshrl.u32 %v1361, 7
        %v1363 = vsub.s32 2, %v1362
        %v1364 = vrot.slane %v1351, %v1363
        %v1365 = vlaneseq
        %v1366 = vshrl.u32 %v1365, 7
        %v1367 = vsub.s32 3, %v1366
        %v1368 = vrot.slane %v1351, %v1367
        %v1501 = vunpack.c.l.b16 %v1223
        %v1502 = vunpack.c.h.b16 %v1223
        %v1503 = vunpack.c.l.b16 %v1224
        %v1504 = vunpack.c.h.b16 %v1224
        %v1505 = vunpack.c.l.b16 %v1225
        %v1506 = vunpack.c.h.b16 %v1225
        %v1507 = vunpack.c.l.b16 %v1226
        %v1508 = vunpack.c.h.b16 %v1226
        %v1509 = vunpack.c.l.b16 %v1227
        %v1510 = vunpack.c.h.b16 %v1227
        %v1511 = vunpack.c.l.b16 %v1228
        %v1512 = vunpack.c.h.b16 %v1228
        %v1513 = vunpack.c.l.b16 %v1229
        %v1514 = vunpack.c.h.b16 %v1229
        %v1515 = vunpack.c.l.b16 %v1230
        %v1516 = vunpack.c.h.b16 %v1230
        %v1517 = vunpack.c.l.b16 %v1231
        %v1518 = vunpack.c.h.b16 %v1231
        %v1519 = vunpack.c.l.b16 %v1232
        %v1520 = vunpack.c.h.b16 %v1232
        %v1521 = vunpack.c.l.b16 %v1233
        %v1522 = vunpack.c.h.b16 %v1233
        %v1523 = vunpack.c.l.b16 %v1234
        %v1524 = vunpack.c.h.b16 %v1234
        %v1525 = vunpack.c.l.b16 %v1235
        %v1526 = vunpack.c.h.b16 %v1235
        %v1527 = vunpack.c.l.b16 %v1236
        %v1528 = vunpack.c.h.b16 %v1236
        %v1529 = vunpack.c.l.b16 %v1237
        %v1530 = vunpack.c.h.b16 %v1237
        %v1531 = vunpack.c.l.b16 %v1238
        %v1532 = vunpack.c.h.b16 %v1238
        %v1533 = vunpack.c.l.b16 %v1239
        %v1534 = vunpack.c.h.b16 %v1239
        %v1535 = vunpack.c.l.b16 %v1240
        %v1536 = vunpack.c.h.b16 %v1240
        %v1537 = vunpack.c.l.b16 %v1241
        %v1538 = vunpack.c.h.b16 %v1241
        %v1539 = vunpack.c.l.b16 %v1242
        %v1540 = vunpack.c.h.b16 %v1242
        %v1541 = vunpack.c.l.b16 %v1243
        %v1542 = vunpack.c.h.b16 %v1243
        %v1543 = vunpack.c.l.b16 %v1244
        %v1544 = vunpack.c.h.b16 %v1244
        %v1545 = vunpack.c.l.b16 %v1245
        %v1546 = vunpack.c.h.b16 %v1245
        %v1547 = vunpack.c.l.b16 %v1246
        %v1548 = vunpack.c.h.b16 %v1246
        %v1549 = vunpack.c.l.b16 %v1247
        %v1550 = vunpack.c.h.b16 %v1247
        %v1551 = vunpack.c.l.b16 %v1248
        %v1552 = vunpack.c.h.b16 %v1248
        %v1553 = vunpack.c.l.b16 %v1249
        %v1554 = vunpack.c.h.b16 %v1249
        %v1555 = vunpack.c.l.b16 %v1250
        %v1556 = vunpack.c.h.b16 %v1250
        %v1557 = vunpack.c.l.b16 %v1251
        %v1558 = vunpack.c.h.b16 %v1251
        %v1559 = vunpack.c.l.b16 %v1252
        %v1560 = vunpack.c.h.b16 %v1252
        %v1561 = vunpack.c.l.b16 %v1253
        %v1562 = vunpack.c.h.b16 %v1253
        %v1563 = vunpack.c.l.b16 %v1254
        %v1564 = vunpack.c.h.b16 %v1254
        %v1565 = vunpack.c.l.b16 %v1255
        %v1566 = vunpack.c.h.b16 %v1255
        %v1567 = vunpack.c.l.b16 %v1256
        %v1568 = vunpack.c.h.b16 %v1256
        %v1569 = vunpack.c.l.b16 %v1257
        %v1570 = vunpack.c.h.b16 %v1257
        %v1571 = vunpack.c.l.b16 %v1258
        %v1572 = vunpack.c.h.b16 %v1258
        %v1573 = vunpack.c.l.b16 %v1259
        %v1574 = vunpack.c.h.b16 %v1259
        %v1575 = vunpack.c.l.b16 %v1260
        %v1576 = vunpack.c.h.b16 %v1260
        %v1577 = vunpack.c.l.b16 %v1261
        %v1578 = vunpack.c.h.b16 %v1261
        %v1579 = vunpack.c.l.b16 %v1262
        %v1580 = vunpack.c.h.b16 %v1262
        %v1581 = vunpack.c.l.b16 %v1263
        %v1582 = vunpack.c.h.b16 %v1263
        %v1583 = vunpack.c.l.b16 %v1264
        %v1584 = vunpack.c.h.b16 %v1264
        %v1585 = vunpack.c.l.b16 %v1265
        %v1586 = vunpack.c.h.b16 %v1265
        %v1587 = vunpack.c.l.b16 %v1266
        %v1588 = vunpack.c.h.b16 %v1266
        %v1589 = vunpack.c.l.b16 %v1267
        %v1590 = vunpack.c.h.b16 %v1267
        %v1591 = vunpack.c.l.b16 %v1268
        %v1592 = vunpack.c.h.b16 %v1268
        %v1593 = vunpack.c.l.b16 %v1269
        %v1594 = vunpack.c.h.b16 %v1269
        %v1595 = vunpack.c.l.b16 %v1270
        %v1596 = vunpack.c.h.b16 %v1270
        %v1597 = vunpack.c.l.b16 %v1271
        %v1598 = vunpack.c.h.b16 %v1271
        %v1599 = vunpack.c.l.b16 %v1272
        %v1600 = vunpack.c.h.b16 %v1272
        %v1601 = vunpack.c.l.b16 %v1273
        %v1602 = vunpack.c.h.b16 %v1273
        %v1603 = vunpack.c.l.b16 %v1274
        %v1604 = vunpack.c.h.b16 %v1274
        %v1605 = vunpack.c.l.b16 %v1275
        %v1606 = vunpack.c.h.b16 %v1275
        %v1607 = vunpack.c.l.b16 %v1276
        %v1608 = vunpack.c.h.b16 %v1276
        %v1609 = vunpack.c.l.b16 %v1277
        %v1610 = vunpack.c.h.b16 %v1277
        %v1611 = vunpack.c.l.b16 %v1278
        %v1612 = vunpack.c.h.b16 %v1278
        %v1613 = vunpack.c.l.b16 %v1279
        %v1614 = vunpack.c.h.b16 %v1279
        %v1615 = vunpack.c.l.b16 %v1280
        %v1616 = vunpack.c.h.b16 %v1280
        %v1617 = vunpack.c.l.b16 %v1281
        %v1618 = vunpack.c.h.b16 %v1281
        %v1619 = vunpack.c.l.b16 %v1282
        %v1620 = vunpack.c.h.b16 %v1282
        %v1621 = vunpack.c.l.b16 %v1283
        %v1622 = vunpack.c.h.b16 %v1283
        %v1623 = vunpack.c.l.b16 %v1284
        %v1624 = vunpack.c.h.b16 %v1284
        %v1625 = vunpack.c.l.b16 %v1285
        %v1626 = vunpack.c.h.b16 %v1285
        %v1627 = vunpack.c.l.b16 %v1286
        %v1628 = vunpack.c.h.b16 %v1286
        %v1629 = vunpack.c.l.b16 %v1287
        %v1630 = vunpack.c.h.b16 %v1287
        %v1631 = vunpack.c.l.b16 %v1288
        %v1632 = vunpack.c.h.b16 %v1288
        %v1633 = vunpack.c.l.b16 %v1289
        %v1634 = vunpack.c.h.b16 %v1289
        %v1635 = vunpack.c.l.b16 %v1290
        %v1636 = vunpack.c.h.b16 %v1290
        %v1637 = vunpack.c.l.b16 %v1291
        %v1638 = vunpack.c.h.b16 %v1291
        %v1639 = vunpack.c.l.b16 %v1292
        %v1640 = vunpack.c.h.b16 %v1292
        %v1641 = vunpack.c.l.b16 %v1293
        %v1642 = vunpack.c.h.b16 %v1293
        %v1643 = vunpack.c.l.b16 %v1294
        %v1644 = vunpack.c.h.b16 %v1294
        %v1645 = vunpack.c.l.b16 %v1295
        %v1646 = vunpack.c.h.b16 %v1295
        %v1647 = vunpack.c.l.b16 %v1296
        %v1648 = vunpack.c.h.b16 %v1296
        %v1649 = vunpack.c.l.b16 %v1297
        %v1650 = vunpack.c.h.b16 %v1297
        %v1651 = vunpack.c.l.b16 %v1298
        %v1652 = vunpack.c.h.b16 %v1298
        %v1653 = vunpack.c.l.b16 %v1299
        %v1654 = vunpack.c.h.b16 %v1299
        %v1655 = vunpack.c.l.b16 %v1300
        %v1656 = vunpack.c.h.b16 %v1300
        %v1657 = vunpack.c.l.b16 %v1301
        %v1658 = vunpack.c.h.b16 %v1301
        %v1659 = vunpack.c.l.b16 %v1302
        %v1660 = vunpack.c.h.b16 %v1302
        %v1661 = vunpack.c.l.b16 %v1303
        %v1662 = vunpack.c.h.b16 %v1303
        %v1663 = vunpack.c.l.b16 %v1304
        %v1664 = vunpack.c.h.b16 %v1304
        %v1665 = vunpack.c.l.b16 %v1305
        %v1666 = vunpack.c.h.b16 %v1305
        %v1667 = vunpack.c.l.b16 %v1306
        %v1668 = vunpack.c.h.b16 %v1306
        %v1669 = vunpack.c.l.b16 %v1307
        %v1670 = vunpack.c.h.b16 %v1307
        %v1671 = vunpack.c.l.b16 %v1308
        %v1672 = vunpack.c.h.b16 %v1308
        %v1673 = vunpack.c.l.b16 %v1309
        %v1674 = vunpack.c.h.b16 %v1309
        %v1675 = vunpack.c.l.b16 %v1310
        %v1676 = vunpack.c.h.b16 %v1310
        %v1677 = vunpack.c.l.b16 %v1311
        %v1678 = vunpack.c.h.b16 %v1311
        %v1679 = vunpack.c.l.b16 %v1312
        %v1680 = vunpack.c.h.b16 %v1312
        %v1681 = vunpack.c.l.b16 %v1313
        %v1682 = vunpack.c.h.b16 %v1313
        %v1683 = vunpack.c.l.b16 %v1314
        %v1684 = vunpack.c.h.b16 %v1314
        %v1685 = vunpack.c.l.b16 %v1315
        %v1686 = vunpack.c.h.b16 %v1315
        %v1687 = vunpack.c.l.b16 %v1316
        %v1688 = vunpack.c.h.b16 %v1316
        %v1689 = vunpack.c.l.b16 %v1317
        %v1690 = vunpack.c.h.b16 %v1317
        %v1691 = vunpack.c.l.b16 %v1318
        %v1692 = vunpack.c.h.b16 %v1318
        %v1693 = vunpack.c.l.b16 %v1319
        %v1694 = vunpack.c.h.b16 %v1319
        %v1695 = vunpack.c.l.b16 %v1320
        %v1696 = vunpack.c.h.b16 %v1320
        %v1697 = vunpack.c.l.b16 %v1321
        %v1698 = vunpack.c.h.b16 %v1321
        %v1699 = vunpack.c.l.b16 %v1322
        %v1700 = vunpack.c.h.b16 %v1322
        %v1701 = vunpack.c.l.b16 %v1323
        %v1702 = vunpack.c.h.b16 %v1323
        %v1703 = vunpack.c.l.b16 %v1324
        %v1704 = vunpack.c.h.b16 %v1324
        %v1705 = vunpack.c.l.b16 %v1325
        %v1706 = vunpack.c.h.b16 %v1325
        %v1707 = vunpack.c.l.b16 %v1326
        %v1708 = vunpack.c.h.b16 %v1326
        %v1709 = vunpack.c.l.b16 %v1327
        %v1710 = vunpack.c.h.b16 %v1327
        %v1711 = vunpack.c.l.b16 %v1328
        %v1712 = vunpack.c.h.b16 %v1328
        %v1713 = vunpack.c.l.b16 %v1329
        %v1714 = vunpack.c.h.b16 %v1329
        %v1715 = vunpack.c.l.b16 %v1330
        %v1716 = vunpack.c.h.b16 %v1330
        %v1717 = vunpack.c.l.b16 %v1331
        %v1718 = vunpack.c.h.b16 %v1331
        %v1719 = vunpack.c.l.b16 %v1332
        %v1720 = vunpack.c.h.b16 %v1332
        %v1721 = vunpack.c.l.b16 %v1333
        %v1722 = vunpack.c.h.b16 %v1333
        %v1723 = vunpack.c.l.b16 %v1334
        %v1724 = vunpack.c.h.b16 %v1334
        %v1725 = vunpack.c.l.b16 %v1335
        %v1726 = vunpack.c.h.b16 %v1335
        %v1727 = vunpack.c.l.b16 %v1336
        %v1728 = vunpack.c.h.b16 %v1336
        %v1729 = vunpack.c.l.b16 %v1337
        %v1730 = vunpack.c.h.b16 %v1337
        %v1731 = vunpack.c.l.b16 %v1338
        %v1732 = vunpack.c.h.b16 %v1338
        %v1733 = vunpack.c.l.b16 %v1339
        %v1734 = vunpack.c.h.b16 %v1339
        %v1735 = vunpack.c.l.b16 %v1340
        %v1736 = vunpack.c.h.b16 %v1340
        %v1737 = vunpack.c.l.b16 %v1341
        %v1738 = vunpack.c.h.b16 %v1341
        %v1739 = vunpack.c.l.b16 %v1342
        %v1740 = vunpack.c.h.b16 %v1342
        %v1741 = vunpack.c.l.b16 %v1343
        %v1742 = vunpack.c.h.b16 %v1343
        %v1743 = vunpack.c.l.b16 %v1344
        %v1744 = vunpack.c.h.b16 %v1344
        %v1745 = vunpack.c.l.b16 %v1345
        %v1746 = vunpack.c.h.b16 %v1345
        %v1747 = vunpack.c.l.b16 %v1346
        %v1748 = vunpack.c.h.b16 %v1346
        %v1749 = vunpack.c.l.b16 %v1347
        %v1750 = vunpack.c.h.b16 %v1347
        %v1751 = vunpack.c.l.b16 %v1348
        %v1752 = vunpack.c.h.b16 %v1348
        %v1753 = vunpack.c.l.b16 %v1349
        %v1754 = vunpack.c.h.b16 %v1349
        %v1755 = vunpack.c.l.b16 %v1350
        %v1756 = vunpack.c.h.b16 %v1350
        %v1757 = vpack.c.b16 %v1505, %v1501
        %v1758 = vpack.c.b16 %v1506, %v1502
        %v1759 = vpack.c.b16 %v1507, %v1503
        %v1760 = vpack.c.b16 %v1508, %v1504
        %v1761 = vpack.c.b16 %v1513, %v1509
        %v1762 = vpack.c.b16 %v1514, %v1510
        %v1763 = vpack.c.b16 %v1515, %v1511
        %v1764 = vpack.c.b16 %v1516, %v1512
        %v1765 = vpack.c.b16 %v1521, %v1517
        %v1766 = vpack.c.b16 %v1522, %v1518
        %v1767 = vpack.c.b16 %v1523, %v1519
        %v1768 = vpack.c.b16 %v1524, %v1520
        %v1769 = vpack.c.b16 %v1529, %v1525
        %v1770 = vpack.c.b16 %v1530, %v1526
        %v1771 = vpack.c.b16 %v1531, %v1527
        %v1772 = vpack.c.b16 %v1532, %v1528
        %v1773 = vpack.c.b16 %v1537, %v1533
        %v1774 = vpack.c.b16 %v1538, %v1534
        %v1775 = vpack.c.b16 %v1539, %v1535
        %v1776 = vpack.c.b16 %v1540, %v1536
        %v1777 = vpack.c.b16 %v1545, %v1541
        %v1778 = vpack.c.b16 %v1546, %v1542
        %v1779 = vpack.c.b16 %v1547, %v1543
        %v1780 = vpack.c.b16 %v1548, %v1544
        %v1781 = vpack.c.b16 %v1553, %v1549
        %v1782 = vpack.c.b16 %v1554, %v1550
        %v1783 = vpack.c.b16 %v1555, %v1551
        %v1784 = vpack.c.b16 %v1556, %v1552
        %v1785 = vpack.c.b16 %v1561, %v1557
        %v1786 = vpack.c.b16 %v1562, %v1558
        %v1787 = vpack.c.b16 %v1563, %v1559
        %v1788 = vpack.c.b16 %v1564, %v1560
        %v1789 = vpack.c.b16 %v1569, %v1565
        %v1790 = vpack.c.b16 %v1570, %v1566
        %v1791 = vpack.c.b16 %v1571, %v1567
        %v1792 = vpack.c.b16 %v1572, %v1568
        %v1793 = vpack.c.b16 %v1577, %v1573
        %v1794 = vpack.c.b16 %v1578, %v1574
        %v1795 = vpack.c.b16 %v1579, %v1575
        %v1796 = vpack.c.b16 %v1580, %v1576
        %v1797 = vpack.c.b16 %v1585, %v1581
        %v1798 = vpack.c.b16 %v1586, %v1582
        %v1799 = vpack.c.b16 %v1587, %v1583
        %v1800 = vpack.c.b16 %v1588, %v1584
        %v1801 = vpack.c.b16 %v1593, %v1589
        %v1802 = vpack.c.b16 %v1594, %v1590
        %v1803 = vpack.c.b16 %v1595, %v1591
        %v1804 = vpack.c.b16 %v1596, %v1592
        %v1805 = vpack.c.b16 %v1601, %v1597
        %v1806 = vpack.c.b16 %v1602, %v1598
        %v1807 = vpack.c.b16 %v1603, %v1599
        %v1808 = vpack.c.b16 %v1604, %v1600
        %v1809 = vpack.c.b16 %v1609, %v1605
        %v1810 = vpack.c.b16 %v1610, %v1606
        %v1811 = vpack.c.b16 %v1611, %v1607
        %v1812 = vpack.c.b16 %v1612, %v1608
        %v1813 = vpack.c.b16 %v1617, %v1613
        %v1814 = vpack.c.b16 %v1618, %v1614
        %v1815 = vpack.c.b16 %v1619, %v1615
        %v1816 = vpack.c.b16 %v1620, %v1616
        %v1817 = vpack.c.b16 %v1625, %v1621
        %v1818 = vpack.c.b16 %v1626, %v1622
        %v1819 = vpack.c.b16 %v1627, %v1623
        %v1820 = vpack.c.b16 %v1628, %v1624
        %v1821 = vpack.c.b16 %v1633, %v1629
        %v1822 = vpack.c.b16 %v1634, %v1630
        %v1823 = vpack.c.b16 %v1635, %v1631
        %v1824 = vpack.c.b16 %v1636, %v1632
        %v1825 = vpack.c.b16 %v1641, %v1637
        %v1826 = vpack.c.b16 %v1642, %v1638
        %v1827 = vpack.c.b16 %v1643, %v1639
        %v1828 = vpack.c.b16 %v1644, %v1640
        %v1829 = vpack.c.b16 %v1649, %v1645
        %v1830 = vpack.c.b16 %v1650, %v1646
        %v1831 = vpack.c.b16 %v1651, %v1647
        %v1832 = vpack.c.b16 %v1652, %v1648
        %v1833 = vpack.c.b16 %v1657, %v1653
        %v1834 = vpack.c.b16 %v1658, %v1654
        %v1835 = vpack.c.b16 %v1659, %v1655
        %v1836 = vpack.c.b16 %v1660, %v1656
        %v1837 = vpack.c.b16 %v1665, %v1661
        %v1838 = vpack.c.b16 %v1666, %v1662
        %v1839 = vpack.c.b16 %v1667, %v1663
        %v1840 = vpack.c.b16 %v1668, %v1664
        %v1841 = vpack.c.b16 %v1673, %v1669
        %v1842 = vpack.c.b16 %v1674, %v1670
        %v1843 = vpack.c.b16 %v1675, %v1671
        %v1844 = vpack.c.b16 %v1676, %v1672
        %v1845 = vpack.c.b16 %v1681, %v1677
        %v1846 = vpack.c.b16 %v1682, %v1678
        %v1847 = vpack.c.b16 %v1683, %v1679
        %v1848 = vpack.c.b16 %v1684, %v1680
        %v1849 = vpack.c.b16 %v1689, %v1685
        %v1850 = vpack.c.b16 %v1690, %v1686
        %v1851 = vpack.c.b16 %v1691, %v1687
        %v1852 = vpack.c.b16 %v1692, %v1688
        %v1853 = vpack.c.b16 %v1697, %v1693
        %v1854 = vpack.c.b16 %v1698, %v1694
        %v1855 = vpack.c.b16 %v1699, %v1695
        %v1856 = vpack.c.b16 %v1700, %v1696
        %v1857 = vpack.c.b16 %v1705, %v1701
        %v1858 = vpack.c.b16 %v1706, %v1702
        %v1859 = vpack.c.b16 %v1707, %v1703
        %v1860 = vpack.c.b16 %v1708, %v1704
        %v1861 = vpack.c.b16 %v1713, %v1709
        %v1862 = vpack.c.b16 %v1714, %v1710
        %v1863 = vpack.c.b16 %v1715, %v1711
        %v1864 = vpack.c.b16 %v1716, %v1712
        %v1865 = vpack.c.b16 %v1721, %v1717
        %v1866 = vpack.c.b16 %v1722, %v1718
        %v1867 = vpack.c.b16 %v1723, %v1719
        %v1868 = vpack.c.b16 %v1724, %v1720
        %v1869 = vpack.c.b16 %v1729, %v1725
        %v1870 = vpack.c.b16 %v1730, %v1726
        %v1871 = vpack.c.b16 %v1731, %v1727
        %v1872 = vpack.c.b16 %v1732, %v1728
        %v1873 = vpack.c.b16 %v1737, %v1733
        %v1874 = vpack.c.b16 %v1738, %v1734
        %v1875 = vpack.c.b16 %v1739, %v1735
        %v1876 = vpack.c.b16 %v1740, %v1736
        %v1877 = vpack.c.b16 %v1745, %v1741
        %v1878 = vpack.c.b16 %v1746, %v1742
        %v1879 = vpack.c.b16 %v1747, %v1743
        %v1880 = vpack.c.b16 %v1748, %v1744
        %v1881 = vpack.c.b16 %v1753, %v1749
        %v1882 = vpack.c.b16 %v1754, %v1750
        %v1883 = vpack.c.b16 %v1755, %v1751
        %v1884 = vpack.c.b16 %v1756, %v1752
        %2013 = vmatprep.subr.bf16.mxu0 %v1758
        %2014 = vmatpush1.bf16.msra.mxu0 %v1757
        %2015 = vmatprep.subr.bf16.mxu0 %v1762
        %2016 = vmatpush1.bf16.msra.mxu0 %v1761
        %2017 = vmatprep.subr.bf16.mxu0 %v1766
        %2018 = vmatpush1.bf16.msra.mxu0 %v1765
        %2019 = vmatprep.subr.bf16.mxu0 %v1770
        %2020 = vmatpush1.bf16.msra.mxu0 %v1769
        %2021 = vmatprep.subr.bf16.mxu0 %v1774
        %2022 = vmatpush1.bf16.msra.mxu0 %v1773
        %2023 = vmatprep.subr.bf16.mxu0 %v1778
        %2024 = vmatpush1.bf16.msra.mxu0 %v1777
        %2025 = vmatprep.subr.bf16.mxu0 %v1782
        %2026 = vmatpush1.bf16.msra.mxu0 %v1781
        %2027 = vmatprep.subr.bf16.mxu0 %v1786
        %2028 = vmatpush1.bf16.msra.mxu0 %v1785
        %2029 = vmatprep.subr.bf16.mxu0 %v1790
        %2030 = vmatpush1.bf16.msra.mxu0 %v1789
        %2031 = vmatprep.subr.bf16.mxu0 %v1794
        %2032 = vmatpush1.bf16.msra.mxu0 %v1793
        %2033 = vmatprep.subr.bf16.mxu0 %v1798
        %2034 = vmatpush1.bf16.msra.mxu0 %v1797
        %2035 = vmatprep.subr.bf16.mxu0 %v1802
        %2036 = vmatpush1.bf16.msra.mxu0 %v1801
        %2037 = vmatprep.subr.bf16.mxu0 %v1806
        %2038 = vmatpush1.bf16.msra.mxu0 %v1805
        %2039 = vmatprep.subr.bf16.mxu0 %v1810
        %2040 = vmatpush1.bf16.msra.mxu0 %v1809
        %2041 = vmatprep.subr.bf16.mxu0 %v1814
        %2042 = vmatpush1.bf16.msra.mxu0 %v1813
        %2043 = vmatprep.subr.bf16.mxu0 %v1818
        %2044 = vmatpush1.bf16.msra.mxu0 %v1817
        %2045 = vmatprep.mubr.bf16.mxu0 %v1220
        %2046 = vmatmul.mubr.bf16.gmra.mrb[0].mxu0 %v1219
        %v2047 = vpop.f32.mrb[0].mxu0
        %v2048 = vadd.f32 %v1356, %v2047
        %v2049 = vpop.f32.mrb[0].mxu0
        %v2050 = vadd.f32 %v1360, %v2049
        %v2051 = vpop.f32.mrb[0].mxu0
        %v2052 = vpop.f32.mrb[0].mxu0
        %2053 = vdwg.mxu0
        %2054 = vmatprep.subr.bf16.mxu0 %v1822
        %2055 = vmatpush1.bf16.msra.mxu0 %v1821
        %2056 = vmatprep.subr.bf16.mxu0 %v1826
        %2057 = vmatpush1.bf16.msra.mxu0 %v1825
        %2058 = vmatprep.subr.bf16.mxu0 %v1830
        %2059 = vmatpush1.bf16.msra.mxu0 %v1829
        %2060 = vmatprep.subr.bf16.mxu0 %v1834
        %2061 = vmatpush1.bf16.msra.mxu0 %v1833
        %2062 = vmatprep.subr.bf16.mxu0 %v1838
        %2063 = vmatpush1.bf16.msra.mxu0 %v1837
        %2064 = vmatprep.subr.bf16.mxu0 %v1842
        %2065 = vmatpush1.bf16.msra.mxu0 %v1841
        %2066 = vmatprep.subr.bf16.mxu0 %v1846
        %2067 = vmatpush1.bf16.msra.mxu0 %v1845
        %2068 = vmatprep.subr.bf16.mxu0 %v1850
        %2069 = vmatpush1.bf16.msra.mxu0 %v1849
        %2070 = vmatprep.subr.bf16.mxu0 %v1854
        %2071 = vmatpush1.bf16.msra.mxu0 %v1853
        %2072 = vmatprep.subr.bf16.mxu0 %v1858
        %2073 = vmatpush1.bf16.msra.mxu0 %v1857
        %2074 = vmatprep.subr.bf16.mxu0 %v1862
        %2075 = vmatpush1.bf16.msra.mxu0 %v1861
        %2076 = vmatprep.subr.bf16.mxu0 %v1866
        %2077 = vmatpush1.bf16.msra.mxu0 %v1865
        %2078 = vmatprep.subr.bf16.mxu0 %v1870
        %2079 = vmatpush1.bf16.msra.mxu0 %v1869
        %2080 = vmatprep.subr.bf16.mxu0 %v1874
        %2081 = vmatpush1.bf16.msra.mxu0 %v1873
        %2082 = vmatprep.subr.bf16.mxu0 %v1878
        %2083 = vmatpush1.bf16.msra.mxu0 %v1877
        %2084 = vmatprep.subr.bf16.mxu0 %v1882
        %2085 = vmatpush1.bf16.msra.mxu0 %v1881
        %2086 = vmatprep.mubr.bf16.mxu0 %v1222
        %2087 = vmatmul.mubr.bf16.gmra.mrb[0].mxu0 %v1221
        %v2088 = vpop.f32.mrb[0].mxu0
        %v2089 = vadd.f32 %v2048, %v2088
        %v2090 = vpop.f32.mrb[0].mxu0
        %v2091 = vadd.f32 %v2050, %v2090
        %v2092 = vpop.f32.mrb[0].mxu0
        %v2093 = vpop.f32.mrb[0].mxu0
        %2094 = vdwg.mxu0
        %2095 = vmatprep.subr.bf16.mxu0 %v1760
        %2096 = vmatpush1.bf16.msra.mxu0 %v1759
        %2097 = vmatprep.subr.bf16.mxu0 %v1764
        %2098 = vmatpush1.bf16.msra.mxu0 %v1763
        %2099 = vmatprep.subr.bf16.mxu0 %v1768
        %2100 = vmatpush1.bf16.msra.mxu0 %v1767
        %2101 = vmatprep.subr.bf16.mxu0 %v1772
        %2102 = vmatpush1.bf16.msra.mxu0 %v1771
        %2103 = vmatprep.subr.bf16.mxu0 %v1776
        %2104 = vmatpush1.bf16.msra.mxu0 %v1775
        %2105 = vmatprep.subr.bf16.mxu0 %v1780
        %2106 = vmatpush1.bf16.msra.mxu0 %v1779
        %2107 = vmatprep.subr.bf16.mxu0 %v1784
        %2108 = vmatpush1.bf16.msra.mxu0 %v1783
        %2109 = vmatprep.subr.bf16.mxu0 %v1788
        %2110 = vmatpush1.bf16.msra.mxu0 %v1787
        %2111 = vmatprep.subr.bf16.mxu0 %v1792
        %2112 = vmatpush1.bf16.msra.mxu0 %v1791
        %2113 = vmatprep.subr.bf16.mxu0 %v1796
        %2114 = vmatpush1.bf16.msra.mxu0 %v1795
        %2115 = vmatprep.subr.bf16.mxu0 %v1800
        %2116 = vmatpush1.bf16.msra.mxu0 %v1799
        %2117 = vmatprep.subr.bf16.mxu0 %v1804
        %2118 = vmatpush1.bf16.msra.mxu0 %v1803
        %2119 = vmatprep.subr.bf16.mxu0 %v1808
        %2120 = vmatpush1.bf16.msra.mxu0 %v1807
        %2121 = vmatprep.subr.bf16.mxu0 %v1812
        %2122 = vmatpush1.bf16.msra.mxu0 %v1811
        %2123 = vmatprep.subr.bf16.mxu0 %v1816
        %2124 = vmatpush1.bf16.msra.mxu0 %v1815
        %2125 = vmatprep.subr.bf16.mxu0 %v1820
        %2126 = vmatpush1.bf16.msra.mxu0 %v1819
        %2127 = vmatprep.mubr.bf16.mxu0 %v1220
        %2128 = vmatmul.mubr.bf16.gmra.mrb[0].mxu0 %v1219
        %v2129 = vpop.f32.mrb[0].mxu0
        %v2130 = vadd.f32 %v1364, %v2129
        %v2131 = vpop.f32.mrb[0].mxu0
        %v2132 = vadd.f32 %v1368, %v2131
        %v2133 = vpop.f32.mrb[0].mxu0
        %v2134 = vpop.f32.mrb[0].mxu0
        %2135 = vdwg.mxu0
        %2136 = vmatprep.subr.bf16.mxu0 %v1824
        %2137 = vmatpush1.bf16.msra.mxu0 %v1823
        %2138 = vmatprep.subr.bf16.mxu0 %v1828
        %2139 = vmatpush1.bf16.msra.mxu0 %v1827
        %2140 = vmatprep.subr.bf16.mxu0 %v1832
        %2141 = vmatpush1.bf16.msra.mxu0 %v1831
        %2142 = vmatprep.subr.bf16.mxu0 %v1836
        %2143 = vmatpush1.bf16.msra.mxu0 %v1835
        %2144 = vmatprep.subr.bf16.mxu0 %v1840
        %2145 = vmatpush1.bf16.msra.mxu0 %v1839
        %2146 = vmatprep.subr.bf16.mxu0 %v1844
        %2147 = vmatpush1.bf16.msra.mxu0 %v1843
        %2148 = vmatprep.subr.bf16.mxu0 %v1848
        %2149 = vmatpush1.bf16.msra.mxu0 %v1847
        %2150 = vmatprep.subr.bf16.mxu0 %v1852
        %2151 = vmatpush1.bf16.msra.mxu0 %v1851
        %2152 = vmatprep.subr.bf16.mxu0 %v1856
        %2153 = vmatpush1.bf16.msra.mxu0 %v1855
        %2154 = vmatprep.subr.bf16.mxu0 %v1860
        %2155 = vmatpush1.bf16.msra.mxu0 %v1859
        %2156 = vmatprep.subr.bf16.mxu0 %v1864
        %2157 = vmatpush1.bf16.msra.mxu0 %v1863
        %2158 = vmatprep.subr.bf16.mxu0 %v1868
        %2159 = vmatpush1.bf16.msra.mxu0 %v1867
        %2160 = vmatprep.subr.bf16.mxu0 %v1872
        %2161 = vmatpush1.bf16.msra.mxu0 %v1871
        %2162 = vmatprep.subr.bf16.mxu0 %v1876
        %2163 = vmatpush1.bf16.msra.mxu0 %v1875
        %2164 = vmatprep.subr.bf16.mxu0 %v1880
        %2165 = vmatpush1.bf16.msra.mxu0 %v1879
        %2166 = vmatprep.subr.bf16.mxu0 %v1884
        %2167 = vmatpush1.bf16.msra.mxu0 %v1883
        %2168 = vmatprep.mubr.bf16.mxu0 %v1222
        %2169 = vmatmul.mubr.bf16.gmra.mrb[0].mxu0 %v1221
        %v2170 = vpop.f32.mrb[0].mxu0
        %v2171 = vadd.f32 %v2130, %v2170
        %v2172 = vpop.f32.mrb[0].mxu0
        %v2173 = vadd.f32 %v2132, %v2172
        %v2174 = vpop.f32.mrb[0].mxu0
        %v2175 = vpop.f32.mrb[0].mxu0
        %2176 = vdwg.mxu0
        %v2177 = vxor.u32 %v2089, 2147483648
        %v2178 = vxor.u32 %v2091, 2147483648
        %v2179 = vxor.u32 %v2171, 2147483648
        %v2180 = vxor.u32 %v2173, 2147483648
        %v2181 = vmul.f32 %v2177, 1.442695
        %v2182 = vpow.pop %v2181
        %v2183 = vmul.f32 %v2178, 1.442695
        %v2184 = vpow.pop %v2183
        %v2185 = vmul.f32 %v2179, 1.442695
        %v2186 = vpow.pop %v2185
        %v2187 = vmul.f32 %v2180, 1.442695
        %v2188 = vpow.pop %v2187
        %v2189 = vadd.f32 %v2182, 1.0
        %v2190 = vadd.f32 %v2184, 1.0
        %v2191 = vadd.f32 %v2186, 1.0
        %v2192 = vadd.f32 %v2188, 1.0
        %v2193 = vrcp.pop %v2189
        %v2194 = vmul.f32 1.0, %v2193
        %v2195 = vrcp.pop %v2190
        %v2196 = vmul.f32 1.0, %v2195
        %v2197 = vrcp.pop %v2191
        %v2198 = vmul.f32 1.0, %v2197
        %v2199 = vrcp.pop %v2192
        %v2200 = vmul.f32 1.0, %v2199
        %2201 = vst [vmem:[%s252] sm:$0xff] %v2194
        %2202 = vst [vmem:[%s252 + $0x8] sm:$0xff] %v2196
        %2203 = vst [vmem:[%s252 + $0x10] sm:$0xff] %v2198
        %2204 = vst [vmem:[%s252 + $0x18] sm:$0xff] %v2200
        %p2205 = scmp.lt.s32.totalorder %s18, 1
        %s2206 = scalar_select %p2205, %s18, 1
        %s2207 = smul.addr %s2206, 4
        %s2208 = smul.addr %s2207, 8
        %s2209 = scalar_lea.vmem %s5, %s2208
        // Predicated region
        $region49: #{attention_m_forward.1} parent=39 // pred_check
          %p2210 = pneg %p146
        $region50: #{attention_m_forward.1} parent=39 // pred_check_branch
          %2212 = sbr.rel (%p2210) target = $region52
        $region51: #{attention_m_forward.1} parent=39 // pred_region
          _
        $region52: #{attention_m_forward.1} parent=39 // pred_fallthru
          _
      $region40: #{attention_m_forward.1} parent=5 // pred_fallthru
        _
      %p2213 = scmp.le.s32.totalorder 2, %s13
      // Predicated region
      $region53: #{attention_m_forward.1} parent=5 // pred_check
        %p2214 = pneg %p2213
      $region54: #{attention_m_forward.1} parent=5 // pred_check_branch
        %2216 = sbr.rel (%p2214) target = $region56
      $region55: #{attention_m_forward.1} parent=5 // pred_region
        %s2217 = ssub.s32 %s13, 2
        // Predicated region
        $region57: #{attention_m_forward.1} parent=55 // pred_check
          %p2218 = pneg %p152
        $region58: #{attention_m_forward.1} parent=55 // pred_check_branch
          %2220 = sbr.rel (%p2218) target = $region60
        $region59: #{attention_m_forward.1} parent=55 // pred_region
          %p2221 = scmp.lt.s32.totalorder %s19, 1
          %s2222 = scalar_select %p2221, %s19, 1
          %s2223 = smul.addr %s2222, 4
          %s2224 = smul.addr %s2223, 8
          %s2225 = scalar_lea.vmem %s5, %s2224
        $region60: #{attention_m_forward.1} parent=55 // pred_fallthru
          _
      $region56: #{attention_m_forward.1} parent=5 // pred_fallthru
        _
    $region6: #{attention_m_forward.1} parent=1 // loop_footer
      %s17 = sadd.s32 1, %s13
    $region7: #{attention_m_forward.1} parent=1 // loop_footer_branch
      %12 = sbr.rel target = $region3
    $region8: #{attention_m_forward.1} parent=1 // loop_exit
      _
    %2226 = vsyncpa [#allocation3], 1
    %s2227 = scalar_lea.sflag [#allocation3], 1
    %2228 = vsyncpa %s2227, 1
    %2229 = vsyncpa [#allocation5], 1

</llo_original>
